<compile_context>
chip_gen: v5e
topology: v5e:2x2
jax: 0.10.0
libtpu: 0.0.40
codegen_flags: <defaults>
</compile_context>

<pallas_src>
import functools

import jax
import jax.numpy as jnp
from jax import lax
from jax.experimental import pallas as pl
from jax.experimental.pallas import tpu as pltpu


def _round_up(x, m):
    return (x + m - 1) // m * m


def _vmem_capacity_bytes():
    try:
        return int(pltpu.get_tpu_info().vmem_capacity_bytes)
    except Exception:
        return 64 << 20  # conservative default (v7x physical VMEM per TC)


def _footprint_bytes(n_pad, tm, tk, p, h2, nh, pout, b_pad, a_resident):
    f4, b2, b1 = 4, 2, 1
    streamed = 2 * (tm * tk * b1                       # A tile (int8, double-buffered)
                    + b_pad * tm * f4                  # pool columns (f32)
                    + (p * h2 + h2 * p) * b2           # per-layer MLP weights (bf16)
                    + (h2 + p) * f4)                   # per-layer biases (f32)
    head = 2 * ((p * nh + nh * pout) * b2              # head weights (bf16)
                + (nh + 3 * pout) * f4                 # head biases + LN params
                + b_pad * pout * f4)                   # output block
    scratch = (tm * p * f4                             # aggregation accumulator
               + 2 * n_pad * p * b2                    # h ping-pong
               + b_pad * p * f4)                       # pooled graph rep
    scratch += n_pad * n_pad * b2 if a_resident else 16 * 128 * b2
    return streamed + head + scratch


def _choose_config(N, P, H2, NH, POUT, B_pad):
    """Pick (TM, TK, N_pad, a_resident, vmem_limit) from the device VMEM capacity."""
    n128 = _round_up(max(N, 1), 128)
    cap = _vmem_capacity_bytes()
    budget = int(cap * 0.85)

    chosen, fallback = None, None
    for tk in (1024, 512, 256, 128):
        for tm in (512, 256, 128):
            npad = _round_up(n128, max(tm, tk))
            if npad * 8 > n128 * 9:          # reject > 12.5% node-padding waste
                continue
            if chosen is None and _footprint_bytes(npad, tm, tk, P, H2, NH, POUT,
                                                   B_pad, True) <= budget:
                chosen = (tm, tk, npad, True)
            if fallback is None and _footprint_bytes(npad, tm, tk, P, H2, NH, POUT,
                                                     B_pad, False) <= budget:
                fallback = (tm, tk, npad, False)
    cfg = chosen if chosen is not None else fallback
    if cfg is None:
        cfg = (128, 128, n128, False)        # TODO(synk): huge graphs may still OOM VMEM
    tm, tk, npad, a_resident = cfg
    fp = _footprint_bytes(npad, tm, tk, P, H2, NH, POUT, B_pad, a_resident)
    vmem_limit = int(min(cap, max(fp + (8 << 20), 32 << 20)))
    return tm, tk, npad, a_resident, vmem_limit


# -----------------------------------------------------------------------------
# Fused kernel: all GIN layers + readout head.
#   grid = (layer l, node tile i, reduction tile k)   -- k innermost
# -----------------------------------------------------------------------------
def _fused_gin_kernel(a_ref, x_hbm, pool_ref,
                      w1_ref, b1_ref, w2_ref, b2_ref,
                      wp1_ref, bp1_ref, wp2_ref, bp2_ref, lng_ref, lnb_ref,
                      out_ref,
                      acc_ref, h_scr, hg_ref, a_vmem,
                      *, TM, TK, N_pad, nout, a_resident):
    l = pl.program_id(0)
    i = pl.program_id(1)
    k = pl.program_id(2)
    nl = pl.num_programs(0)
    ni = pl.num_programs(1)
    nk = pl.num_programs(2)

    # ---- one-time prologue: bring padded node features into the VMEM ping-pong ----
    # Layer l reads slot (l+1)&1 and writes slot l&1, so x goes into slot 1.
    @pl.when((l == 0) & (i == 0) & (k == 0))
    def _():
        pltpu.sync_copy(x_hbm, h_scr.at[pl.ds(N_pad, N_pad), :])

    @pl.when(k == 0)
    def _():
        acc_ref[...] = jnp.zeros_like(acc_ref)

    # ---- A tile: int8 stream -> bf16, optionally cached in VMEM across layers ----
    row0 = pl.multiple_of(i * TM, TM)
    col0 = pl.multiple_of(k * TK, TK)
    if a_resident:
        @pl.when(l == 0)
        def _():
            a_vmem[pl.ds(row0, TM), pl.ds(col0, TK)] = a_ref[...].astype(jnp.bfloat16)
        a_tile = a_vmem[pl.ds(row0, TM), pl.ds(col0, TK)]
    else:
        a_tile = a_ref[...].astype(jnp.bfloat16)

    # ---- aggregation: acc += (A+I)[i-tile, k-tile] @ h_prev[k-tile] ----------
    read_start = pl.multiple_of(((l + 1) & 1) * N_pad + k * TK, TK)
    h_prev = h_scr[pl.ds(read_start, TK), :]
    acc_ref[...] += jnp.dot(a_tile, h_prev, preferred_element_type=jnp.float32)

    # ---- epilogue: MLP + folded BatchNorm (+ ReLU) + fused readout -----------
    @pl.when(k == nk - 1)
    def _():
        agg = acc_ref[...]                                            # [TM, P] f32
        z = jnp.dot(agg.astype(jnp.bfloat16), w1_ref[0],
                    preferred_element_type=jnp.float32) + b1_ref[0]
        z = jnp.maximum(z, 0.0)
        h2 = jnp.dot(z.astype(jnp.bfloat16), w2_ref[0],
                     preferred_element_type=jnp.float32) + b2_ref[0]
        # BatchNorm1d (inference) is folded into w2/b2.
        # TODO(synk): nn.Dropout(0.1) is identity at inference; training dropout not implemented.

        @pl.when(l < nl - 1)
        def _():
            # non-last layers: ReLU, keep result resident in VMEM for the next layer
            write_start = pl.multiple_of((l & 1) * N_pad + i * TM, TM)
            h_scr[pl.ds(write_start, TM), :] = jnp.maximum(h2, 0.0).astype(h_scr.dtype)

        @pl.when(l == nl - 1)
        def _():
            # last layer: no ReLU (matches the module); fuse global_mean_pool + head
            @pl.when(i == 0)
            def _():
                hg_ref[...] = jnp.zeros_like(hg_ref)

            hg_ref[...] += jnp.dot(pool_ref[...], h2,
                                   preferred_element_type=jnp.float32)

            @pl.when(i == ni - 1)
            def _():
                hg = hg_ref[...]                                      # [B_pad, P] f32
                t = jnp.dot(hg.astype(jnp.bfloat16), wp1_ref[...],
                            preferred_element_type=jnp.float32) + bp1_ref[...]
                t = jnp.maximum(t, 0.0)
                y = jnp.dot(t.astype(jnp.bfloat16), wp2_ref[...],
                            preferred_element_type=jnp.float32) + bp2_ref[...]
                # LayerNorm over the real `nout` lanes only (the rest are padding).
                col = lax.broadcasted_iota(jnp.int32, y.shape, 1)
                mask = col < nout
                inv_n = 1.0 / nout
                mu = jnp.sum(jnp.where(mask, y, 0.0), axis=-1, keepdims=True) * inv_n
                diff = jnp.where(mask, y - mu, 0.0)
                var = jnp.sum(diff * diff, axis=-1, keepdims=True) * inv_n
                yn = diff * lax.rsqrt(var + 1e-5)
                out_ref[...] = yn * lng_ref[...] + lnb_ref[...]


def _fused_gin_call(a_pad, x_pad, pool, prep, *, nout, nlayers,
                    TM, TK, a_resident, vmem_limit):
    N_pad = a_pad.shape[0]
    P = x_pad.shape[1]
    H2 = prep["w1_all"].shape[2]
    NH = prep["wp1"].shape[1]
    POUT = prep["wp2"].shape[1]
    B_pad = pool.shape[0]
    ni, nk = N_pad // TM, N_pad // TK
    last = nlayers - 1

    kernel = functools.partial(_fused_gin_kernel, TM=TM, TK=TK, N_pad=N_pad,
                               nout=nout, a_resident=a_resident)

    if a_resident:
        # Stream each A tile exactly once (layer 0); pin to block (0,0) afterwards so
        # Pallas skips the redundant DMA, and read the VMEM-resident copy instead.
        a_map = lambda l, i, k: (jnp.where(l == 0, i, 0), jnp.where(l == 0, k, 0))
        a_scr_shape = (N_pad, N_pad)
    else:
        a_map = lambda l, i, k: (i, k)
        a_scr_shape = (16, 128)  # unused dummy

    # Pool columns are only consumed in the last layer; pin the DMA otherwise.
    pool_map = lambda l, i, k: (0, jnp.where(l == last, i, 0))

    grid_spec = pltpu.PrefetchScalarGridSpec(
        num_scalar_prefetch=0,
        grid=(nlayers, ni, nk),
        in_specs=[
            pl.BlockSpec((TM, TK), a_map),                        # (A+I) tiles, int8
            pl.BlockSpec(memory_space=pl.ANY),                    # x (bf16) stays in HBM
            pl.BlockSpec((B_pad, TM), pool_map),                  # mean-pool columns, f32
            pl.BlockSpec((1, P, H2), lambda l, i, k: (l, 0, 0)),  # W1[l] (bf16)
            pl.BlockSpec((1, 1, H2), lambda l, i, k: (l, 0, 0)),  # b1[l]
            pl.BlockSpec((1, H2, P), lambda l, i, k: (l, 0, 0)),  # W2[l] (bf16, BN folded)
            pl.BlockSpec((1, 1, P), lambda l, i, k: (l, 0, 0)),   # b2[l] (BN folded)
            pl.BlockSpec((P, NH), lambda l, i, k: (0, 0)),        # projection1 W (bf16)
            pl.BlockSpec((1, NH), lambda l, i, k: (0, 0)),        # projection1 b
            pl.BlockSpec((NH, POUT), lambda l, i, k: (0, 0)),     # projection2 W (bf16)
            pl.BlockSpec((1, POUT), lambda l, i, k: (0, 0)),      # projection2 b
            pl.BlockSpec((1, POUT), lambda l, i, k: (0, 0)),      # ln2 gamma
            pl.BlockSpec((1, POUT), lambda l, i, k: (0, 0)),      # ln2 beta
        ],
        out_specs=pl.BlockSpec((B_pad, POUT), lambda l, i, k: (0, 0)),
        scratch_shapes=[
            pltpu.VMEM((TM, P), jnp.float32),          # aggregation accumulator
            pltpu.VMEM((2 * N_pad, P), jnp.bfloat16),  # h ping-pong across layers
            pltpu.VMEM((B_pad, P), jnp.float32),       # pooled graph representation
            pltpu.VMEM(a_scr_shape, jnp.bfloat16),     # VMEM-resident (A+I) (or dummy)
        ],
    )

    return pl.pallas_call(
        kernel,
        grid_spec=grid_spec,
        out_shape=jax.ShapeDtypeStruct((B_pad, POUT), jnp.float32),
        compiler_params=pltpu.CompilerParams(
            # Layers are sequentially dependent and node tiles communicate through the
            # VMEM-resident h scratch, so the grid cannot be sharded across TensorCores
            # in this fused form.  TODO(synk): v7x 2-TC split via core_map.
            dimension_semantics=("arbitrary", "arbitrary", "arbitrary"),
            vmem_limit_bytes=vmem_limit,
        ),
    )(a_pad, x_pad, pool,
      prep["w1_all"], prep["b1_all"], prep["w2_all"], prep["b2_all"],
      prep["wp1"], prep["bp1"], prep["wp2"], prep["bp2"],
      prep["ln_g"], prep["ln_b"])


# -----------------------------------------------------------------------------
# Parameter preparation: pad every feature dim to 128 lanes, fold inference
# BatchNorm into the second Linear of each GIN MLP, stack per-layer weights,
# and store all matmul weights in bf16 (biases / LN params stay f32).
# -----------------------------------------------------------------------------
def prepare_params(params, P):
    layers = params["layers"]
    nl = len(layers)
    ghc = layers[0]["w2"].shape[1]
    h2d = 2 * ghc
    nhid = params["wp1"].shape[1]
    nout = params["wp2"].shape[1]
    H2 = _round_up(h2d, 128)
    NH = _round_up(nhid, 128)
    POUT = _round_up(nout, 128)

    w1_all = jnp.zeros((nl, P, H2), jnp.float32)
    b1_all = jnp.zeros((nl, 1, H2), jnp.float32)
    w2_all = jnp.zeros((nl, H2, P), jnp.float32)
    b2_all = jnp.zeros((nl, 1, P), jnp.float32)
    for idx, lp in enumerate(layers):
        fin = lp["w1"].shape[0]
        # fold: bn(z@W2 + b2) = z @ (W2*s) + ((b2-mean)*s + beta),  s = gamma*rsqrt(var+eps)
        s = lp["bn_gamma"] / jnp.sqrt(lp["bn_var"] + 1e-5)
        w2f = lp["w2"] * s
        b2f = (lp["b2"] - lp["bn_mean"]) * s + lp["bn_beta"]
        w1_all = w1_all.at[idx, :fin, :h2d].set(lp["w1"])
        b1_all = b1_all.at[idx, :, :h2d].set(lp["b1"])
        w2_all = w2_all.at[idx, :h2d, :ghc].set(w2f)
        b2_all = b2_all.at[idx, :, :ghc].set(b2f)

    wp1 = jnp.zeros((P, NH), jnp.float32).at[:ghc, :nhid].set(params["wp1"])
    bp1 = jnp.zeros((1, NH), jnp.float32).at[:, :nhid].set(params["bp1"])
    wp2 = jnp.zeros((NH, POUT), jnp.float32).at[:nhid, :nout].set(params["wp2"])
    bp2 = jnp.zeros((1, POUT), jnp.float32).at[:, :nout].set(params["bp2"])
    ln_g = jnp.zeros((1, POUT), jnp.float32).at[:, :nout].set(params["ln2_gamma"])
    ln_b = jnp.zeros((1, POUT), jnp.float32).at[:, :nout].set(params["ln2_beta"])
    return dict(w1_all=w1_all.astype(jnp.bfloat16), b1_all=b1_all,
                w2_all=w2_all.astype(jnp.bfloat16), b2_all=b2_all,
                wp1=wp1.astype(jnp.bfloat16), bp1=bp1,
                wp2=wp2.astype(jnp.bfloat16), bp2=bp2,
                ln_g=ln_g, ln_b=ln_b)


# -----------------------------------------------------------------------------
# Full GINEncoder forward (JAX glue around the fused Pallas kernel).
# -----------------------------------------------------------------------------
def gin_encoder_forward(params, x, edge_index, batch, num_graphs):
    N, F = x.shape
    ghc = params["layers"][0]["w2"].shape[1]
    nhid = params["wp1"].shape[1]
    nout = params["wp2"].shape[1]
    nlayers = len(params["layers"])

    P = _round_up(max(F, ghc), 128)
    H2 = _round_up(2 * ghc, 128)
    NH = _round_up(nhid, 128)
    POUT = _round_up(nout, 128)
    B_pad = _round_up(num_graphs, 8)

    TM, TK, N_pad, a_resident, vmem_limit = _choose_config(N, P, H2, NH, POUT, B_pad)

    # ---- glue (not hot path): dense (A+I) at 1 byte/element, padded features, pool ----
    a = jnp.zeros((N_pad, N_pad), jnp.int32)
    a = a.at[edge_index[1], edge_index[0]].add(1)        # rows = targets (GIN sum aggr)
    a = a.at[jnp.arange(N), jnp.arange(N)].add(1)        # "(1+eps)*x" self term, eps=0
    a_pad = a.astype(jnp.int8)

    x_pad = jnp.zeros((N_pad, P), jnp.float32).at[:N, :F].set(x).astype(jnp.bfloat16)

    onehot = (batch[None, :] == jnp.arange(num_graphs)[:, None]).astype(jnp.float32)
    counts = jnp.maximum(onehot.sum(axis=1, keepdims=True), 1.0)
    pool = jnp.zeros((B_pad, N_pad), jnp.float32).at[:num_graphs, :N].set(onehot / counts)

    prep = prepare_params(params, P)
    out = _fused_gin_call(a_pad, x_pad, pool, prep, nout=nout, nlayers=nlayers,
                          TM=TM, TK=TK, a_resident=a_resident, vmem_limit=vmem_limit)
    return out[:num_graphs, :nout]


# Pure-JAX reference (f32, unfolded BN) for a tolerance check.
def reference_forward(params, x, edge_index, batch, num_graphs):
    N = x.shape[0]
    a = jnp.zeros((N, N), jnp.float32).at[edge_index[1], edge_index[0]].add(1.0)
    a = a + jnp.eye(N, dtype=jnp.float32)
    h = x.astype(jnp.float32)
    nl = len(params["layers"])
    for i, lp in enumerate(params["layers"]):
        agg = a @ h
        z = jnp.maximum(agg @ lp["w1"] + lp["b1"], 0.0)
        h2 = z @ lp["w2"] + lp["b2"]
        h2 = (h2 - lp["bn_mean"]) / jnp.sqrt(lp["bn_var"] + 1e-5) * lp["bn_gamma"] + lp["bn_beta"]
        h = h2 if i == nl - 1 else jnp.maximum(h2, 0.0)
    onehot = (batch[None, :] == jnp.arange(num_graphs)[:, None]).astype(jnp.float32)
    pool = onehot / jnp.maximum(onehot.sum(axis=1, keepdims=True), 1.0)
    hg = pool @ h
    t = jnp.maximum(hg @ params["wp1"] + params["bp1"], 0.0)
    y = t @ params["wp2"] + params["bp2"]
    mu = y.mean(axis=-1, keepdims=True)
    var = ((y - mu) ** 2).mean(axis=-1, keepdims=True)
    return (y - mu) / jnp.sqrt(var + 1e-5) * params["ln2_gamma"] + params["ln2_beta"]


# -----------------------------------------------------------------------------
# Deterministic parameter construction (shapes follow the module __init__).
# -----------------------------------------------------------------------------
def init_params(key, num_node_features, nout, nhid, nlayers, ghc):
    def dense(k, fan_in, fan_out):
        kw, kb = jax.random.split(k)
        w = jax.random.normal(kw, (fan_in, fan_out), jnp.float32) * (1.0 / jnp.sqrt(fan_in))
        b = jax.random.normal(kb, (1, fan_out), jnp.float32) * 0.05
        return w, b

    keys = jax.random.split(key, nlayers + 3)
    layers = []
    for i in range(nlayers):
        n_in = num_node_features if i == 0 else ghc
        k1, k2, k3 = jax.random.split(keys[i], 3)
        w1, b1 = dense(k1, n_in, 2 * ghc)
        w2, b2 = dense(k2, 2 * ghc, ghc)
        kg, kb2, km, kv = jax.random.split(k3, 4)
        layers.append(dict(
            w1=w1, b1=b1, w2=w2, b2=b2,
            bn_gamma=1.0 + 0.1 * jax.random.normal(kg, (1, ghc), jnp.float32),
            bn_beta=0.1 * jax.random.normal(kb2, (1, ghc), jnp.float32),
            bn_mean=0.1 * jax.random.normal(km, (1, ghc), jnp.float32),
            bn_var=1.0 + 0.1 * jnp.abs(jax.random.normal(kv, (1, ghc), jnp.float32)),
        ))
    wp1, bp1 = dense(keys[nlayers], ghc, nhid)
    wp2, bp2 = dense(keys[nlayers + 1], nhid, nout)
    kg, kb = jax.random.split(keys[nlayers + 2])
    return dict(
        layers=layers,
        wp1=wp1, bp1=bp1, wp2=wp2, bp2=bp2,
        ln2_gamma=1.0 + 0.1 * jax.random.normal(kg, (1, nout), jnp.float32),
        ln2_beta=0.1 * jax.random.normal(kb, (1, nout), jnp.float32),
    )


if __name__ == "__main__":
    # Small synthetic graph batch: 2 graphs x 12 nodes each.
    num_node_features, nout, nhid, nlayers, ghc = 16, 16, 32, 3, 32
    nodes_per_graph, num_graphs = 12, 2
    n = nodes_per_graph * num_graphs

    key = jax.random.PRNGKey(0)
    kx, kp, _ = jax.random.split(key, 3)

    x = jax.random.normal(kx, (n, num_node_features), jnp.float32)
    batch = jnp.repeat(jnp.arange(num_graphs, dtype=jnp.int32), nodes_per_graph)

    # Deterministic edges: undirected ring inside each graph + a few chords.
    src_list, dst_list = [], []
    for g in range(num_graphs):
        base = g * nodes_per_graph
        for i in range(nodes_per_graph):
            a_node, b_node = base + i, base + (i + 1) % nodes_per_graph
            src_list += [a_node, b_node]
            dst_list += [b_node, a_node]
        for i in range(0, nodes_per_graph, 3):
            a_node, b_node = base + i, base + (i + 5) % nodes_per_graph
            src_list += [a_node, b_node]
            dst_list += [b_node, a_node]
    edge_index = jnp.array([src_list, dst_list], dtype=jnp.int32)

    params = init_params(kp, num_node_features, nout, nhid, nlayers, ghc)

    out = gin_encoder_forward(params, x, edge_index, batch, num_graphs)
    out = jax.block_until_ready(out)
    ref = reference_forward(params, x, edge_index, batch, num_graphs)

    assert out.shape == (num_graphs, nout)
    assert jnp.all(jnp.isfinite(out))
    # bf16 is used for the aggregation and MLP matmul operands -> loose tolerance.
    assert float(jnp.max(jnp.abs(out - ref))) < 0.25
    print("KERNEL_OK")
</pallas_src>

<mosaic_0001>
module attributes {stable_mosaic.version = 11 : i64} {
  func.func @_fused_gin_kernel(%arg0: i32, %arg1: i32, %arg2: i32, %arg3: memref<128x128xi8, #tpu.memory_space<vmem>>, %arg4: memref<128x128xbf16, #tpu.memory_space<any>>, %arg5: memref<8x128xf32, #tpu.memory_space<vmem>>, %arg6: memref<1x128x128xbf16, #tpu.memory_space<vmem>>, %arg7: memref<1x1x128xf32, #tpu.memory_space<vmem>>, %arg8: memref<1x128x128xbf16, #tpu.memory_space<vmem>>, %arg9: memref<1x1x128xf32, #tpu.memory_space<vmem>>, %arg10: memref<128x128xbf16, #tpu.memory_space<vmem>>, %arg11: memref<1x128xf32, #tpu.memory_space<vmem>>, %arg12: memref<128x128xbf16, #tpu.memory_space<vmem>>, %arg13: memref<1x128xf32, #tpu.memory_space<vmem>>, %arg14: memref<1x128xf32, #tpu.memory_space<vmem>>, %arg15: memref<1x128xf32, #tpu.memory_space<vmem>>, %arg16: memref<8x128xf32, #tpu.memory_space<vmem>>, %arg17: memref<128x128xf32, #tpu.memory_space<vmem>>, %arg18: memref<256x128xbf16, #tpu.memory_space<vmem>>, %arg19: memref<8x128xf32, #tpu.memory_space<vmem>>, %arg20: memref<128x128xbf16, #tpu.memory_space<vmem>>) attributes {dimension_semantics = [#tpu.dimension_semantics<arbitrary>, #tpu.dimension_semantics<arbitrary>, #tpu.dimension_semantics<arbitrary>], iteration_bounds = array<i64: 3, 1, 1>, scalar_prefetch = 0 : i64, scratch_operands = 4 : i64, tpu.core_type = #tpu.core_type<tc>, window_params = [{transform_indices = @transform_0, window_bounds = array<i64: 128, 128>}, {}, {transform_indices = @transform_2, window_bounds = array<i64: 8, 128>}, {transform_indices = @transform_3, window_bounds = array<i64: 1, 128, 128>}, {transform_indices = @transform_4, window_bounds = array<i64: 1, 1, 128>}, {transform_indices = @transform_5, window_bounds = array<i64: 1, 128, 128>}, {transform_indices = @transform_6, window_bounds = array<i64: 1, 1, 128>}, {pipeline_mode = #tpu.pipeline_mode<synchronous>, transform_indices = @transform_7, window_bounds = array<i64: 128, 128>}, {pipeline_mode = #tpu.pipeline_mode<synchronous>, transform_indices = @transform_8, window_bounds = array<i64: 1, 128>}, {pipeline_mode = #tpu.pipeline_mode<synchronous>, transform_indices = @transform_9, window_bounds = array<i64: 128, 128>}, {pipeline_mode = #tpu.pipeline_mode<synchronous>, transform_indices = @transform_10, window_bounds = array<i64: 1, 128>}, {pipeline_mode = #tpu.pipeline_mode<synchronous>, transform_indices = @transform_11, window_bounds = array<i64: 1, 128>}, {pipeline_mode = #tpu.pipeline_mode<synchronous>, transform_indices = @transform_12, window_bounds = array<i64: 1, 128>}, {pipeline_mode = #tpu.pipeline_mode<synchronous>, transform_indices = @transform_13, window_bounds = array<i64: 8, 128>}]} {
    %c0_i32 = arith.constant 0 : i32
    %0 = arith.cmpi eq, %arg0, %c0_i32 : i32
    %c0_i32_0 = arith.constant 0 : i32
    %1 = arith.cmpi eq, %arg1, %c0_i32_0 : i32
    %2 = arith.andi %0, %1 : i1
    %c0_i32_1 = arith.constant 0 : i32
    %3 = arith.cmpi eq, %arg2, %c0_i32_1 : i32
    %4 = arith.andi %2, %3 : i1
    %5 = arith.extui %4 : i1 to i32
    %c0_i32_2 = arith.constant 0 : i32
    %6 = arith.cmpi ne, %5, %c0_i32_2 : i32
    scf.if %6 {
      "tpu.region"() ({
        %35 = tpu.sem_alloc : memref<!tpu.dma_semaphore, #tpu.memory_space<semaphore_mem>>
        %c128_i32_17 = arith.constant 128 : i32
        %c0_i32_18 = arith.constant 0 : i32
        %36 = tpu.memref_slice %arg18[%c128_i32_17, %c0_i32_18] : memref<256x128xbf16, #tpu.memory_space<vmem>> -> memref<128x128xbf16, #tpu.memory_space<vmem>>
        tpu.enqueue_dma source(%arg4 : memref<128x128xbf16, #tpu.memory_space<any>>) target(%36 : memref<128x128xbf16, #tpu.memory_space<vmem>>) target_semaphore(%35 : memref<!tpu.dma_semaphore, #tpu.memory_space<semaphore_mem>>)
        %c128_i32_19 = arith.constant 128 : i32
        %c0_i32_20 = arith.constant 0 : i32
        %37 = tpu.memref_slice %arg18[%c128_i32_19, %c0_i32_20] : memref<256x128xbf16, #tpu.memory_space<vmem>> -> memref<128x128xbf16, #tpu.memory_space<vmem>>
        tpu.wait_dma2 semaphore(%35 : memref<!tpu.dma_semaphore, #tpu.memory_space<semaphore_mem>>) src(%arg4 : memref<128x128xbf16, #tpu.memory_space<any>>) dst(%37 : memref<128x128xbf16, #tpu.memory_space<vmem>>)
        tpu.yield
      }) : () -> ()
    } else {
    }
    %c0_i32_3 = arith.constant 0 : i32
    %7 = arith.cmpi eq, %arg2, %c0_i32_3 : i32
    %8 = arith.extui %7 : i1 to i32
    %c0_i32_4 = arith.constant 0 : i32
    %9 = arith.cmpi ne, %8, %c0_i32_4 : i32
    scf.if %9 {
      %cst_17 = arith.constant 0.000000e+00 : f32
      %35 = vector.broadcast %cst_17 : f32 to vector<128x128xf32>
      %c0_18 = arith.constant 0 : index
      %c0_19 = arith.constant 0 : index
      %36 = vector.load %arg17[%c0_18, %c0_19] : memref<128x128xf32, #tpu.memory_space<vmem>>, vector<128x128xf32>
      tpu.vector_store %arg17[%c0_18, %c0_19], %35 {strides = array<i32>} : memref<128x128xf32, #tpu.memory_space<vmem>>, vector<128x128xf32>,
    } else {
    }
    %c128_i32 = arith.constant 128 : i32
    %10 = arith.muli %arg1, %c128_i32 : i32
    %11 = tpu.assume_multiple %10, 128 : i32
    %c128_i32_5 = arith.constant 128 : i32
    %12 = arith.muli %arg2, %c128_i32_5 : i32
    %13 = tpu.assume_multiple %12, 128 : i32
    %c0_i32_6 = arith.constant 0 : i32
    %14 = arith.cmpi eq, %arg0, %c0_i32_6 : i32
    %15 = arith.extui %14 : i1 to i32
    %c0_i32_7 = arith.constant 0 : i32
    %16 = arith.cmpi ne, %15, %c0_i32_7 : i32
    scf.if %16 {
      %c0_17 = arith.constant 0 : index
      %c0_18 = arith.constant 0 : index
      %35 = vector.load %arg3[%c0_17, %c0_18] : memref<128x128xi8, #tpu.memory_space<vmem>>, vector<128x128xi8>
      %36 = arith.sitofp %35 : vector<128x128xi8> to vector<128x128xbf16>
      %37 = arith.index_cast %11 : i32 to index
      %38 = arith.index_cast %13 : i32 to index
      %39 = vector.load %arg20[%37, %38] : memref<128x128xbf16, #tpu.memory_space<vmem>>, vector<128x128xbf16>
      tpu.vector_store %arg20[%37, %38], %36 {strides = array<i32>} : memref<128x128xbf16, #tpu.memory_space<vmem>>, vector<128x128xbf16>,
    } else {
    }
    %17 = arith.index_cast %11 : i32 to index
    %18 = arith.index_cast %13 : i32 to index
    %19 = vector.load %arg20[%17, %18] : memref<128x128xbf16, #tpu.memory_space<vmem>>, vector<128x128xbf16>
    %c1_i32 = arith.constant 1 : i32
    %20 = arith.addi %arg0, %c1_i32 : i32
    %c1_i32_8 = arith.constant 1 : i32
    %21 = arith.andi %20, %c1_i32_8 : i32
    %c128_i32_9 = arith.constant 128 : i32
    %22 = arith.muli %21, %c128_i32_9 : i32
    %c128_i32_10 = arith.constant 128 : i32
    %23 = arith.muli %arg2, %c128_i32_10 : i32
    %24 = arith.addi %22, %23 : i32
    %25 = tpu.assume_multiple %24, 128 : i32
    %26 = arith.index_cast %25 : i32 to index
    %c0 = arith.constant 0 : index
    %27 = vector.load %arg18[%26, %c0] : memref<256x128xbf16, #tpu.memory_space<vmem>>, vector<128x128xbf16>
    %c0_11 = arith.constant 0 : index
    %c0_12 = arith.constant 0 : index
    %28 = vector.load %arg17[%c0_11, %c0_12] : memref<128x128xf32, #tpu.memory_space<vmem>>, vector<128x128xf32>
    %cst = arith.constant dense<0.000000e+00> : vector<128x128xf32>
    %29 = tpu.matmul %19, %27, %cst {dimension_numbers = #tpu.dot_dimension_numbers<[1], [0], [0], [1], [0, 0, 1, 1], [], []>} : vector<128x128xbf16>, vector<128x128xbf16>, vector<128x128xf32> -> vector<128x128xf32>
    %30 = arith.addf %28, %29 : vector<128x128xf32>
    %c0_13 = arith.constant 0 : index
    %c0_14 = arith.constant 0 : index
    %31 = vector.load %arg17[%c0_13, %c0_14] : memref<128x128xf32, #tpu.memory_space<vmem>>, vector<128x128xf32>
    tpu.vector_store %arg17[%c0_13, %c0_14], %30 {strides = array<i32>} : memref<128x128xf32, #tpu.memory_space<vmem>>, vector<128x128xf32>,
    %c0_i32_15 = arith.constant 0 : i32
    %32 = arith.cmpi eq, %arg2, %c0_i32_15 : i32
    %33 = arith.extui %32 : i1 to i32
    %c0_i32_16 = arith.constant 0 : i32
    %34 = arith.cmpi ne, %33, %c0_i32_16 : i32
    scf.if %34 {
      %c0_17 = arith.constant 0 : index
      %c0_18 = arith.constant 0 : index
      %35 = vector.load %arg17[%c0_17, %c0_18] : memref<128x128xf32, #tpu.memory_space<vmem>>, vector<128x128xf32>
      %36 = arith.truncf %35 : vector<128x128xf32> to vector<128x128xbf16>
      %c0_19 = arith.constant 0 : index
      %c0_20 = arith.constant 0 : index
      %c0_21 = arith.constant 0 : index
      %37 = vector.load %arg6[%c0_19, %c0_20, %c0_21] : memref<1x128x128xbf16, #tpu.memory_space<vmem>>, vector<1x128x128xbf16>
      %38 = vector.shape_cast %37 : vector<1x128x128xbf16> to vector<128x128xbf16>
      %cst_22 = arith.constant dense<0.000000e+00> : vector<128x128xf32>
      %39 = tpu.matmul %36, %38, %cst_22 {dimension_numbers = #tpu.dot_dimension_numbers<[1], [0], [0], [1], [0, 0, 1, 1], [], []>} : vector<128x128xbf16>, vector<128x128xbf16>, vector<128x128xf32> -> vector<128x128xf32>
      %c0_23 = arith.constant 0 : index
      %c0_24 = arith.constant 0 : index
      %c0_25 = arith.constant 0 : index
      %40 = vector.load %arg7[%c0_23, %c0_24, %c0_25] : memref<1x1x128xf32, #tpu.memory_space<vmem>>, vector<1x1x128xf32>
      %41 = vector.shape_cast %40 : vector<1x1x128xf32> to vector<1x128xf32>
      %42 = vector.broadcast %41 : vector<1x128xf32> to vector<128x128xf32>
      %43 = arith.addf %39, %42 : vector<128x128xf32>
      %cst_26 = arith.constant 0.000000e+00 : f32
      %44 = vector.broadcast %cst_26 : f32 to vector<128x128xf32>
      %45 = arith.maximumf %43, %44 : vector<128x128xf32>
      %46 = arith.truncf %45 : vector<128x128xf32> to vector<128x128xbf16>
      %c0_27 = arith.constant 0 : index
      %c0_28 = arith.constant 0 : index
      %c0_29 = arith.constant 0 : index
      %47 = vector.load %arg8[%c0_27, %c0_28, %c0_29] : memref<1x128x128xbf16, #tpu.memory_space<vmem>>, vector<1x128x128xbf16>
      %48 = vector.shape_cast %47 : vector<1x128x128xbf16> to vector<128x128xbf16>
      %cst_30 = arith.constant dense<0.000000e+00> : vector<128x128xf32>
      %49 = tpu.matmul %46, %48, %cst_30 {dimension_numbers = #tpu.dot_dimension_numbers<[1], [0], [0], [1], [0, 0, 1, 1], [], []>} : vector<128x128xbf16>, vector<128x128xbf16>, vector<128x128xf32> -> vector<128x128xf32>
      %c0_31 = arith.constant 0 : index
      %c0_32 = arith.constant 0 : index
      %c0_33 = arith.constant 0 : index
      %50 = vector.load %arg9[%c0_31, %c0_32, %c0_33] : memref<1x1x128xf32, #tpu.memory_space<vmem>>, vector<1x1x128xf32>
      %51 = vector.shape_cast %50 : vector<1x1x128xf32> to vector<1x128xf32>
      %52 = vector.broadcast %51 : vector<1x128xf32> to vector<128x128xf32>
      %53 = arith.addf %49, %52 : vector<128x128xf32>
      %c2_i32 = arith.constant 2 : i32
      %54 = arith.cmpi slt, %arg0, %c2_i32 : i32
      %55 = arith.extui %54 : i1 to i32
      %c0_i32_34 = arith.constant 0 : i32
      %56 = arith.cmpi ne, %55, %c0_i32_34 : i32
      scf.if %56 {
        %c1_i32_37 = arith.constant 1 : i32
        %60 = arith.andi %arg0, %c1_i32_37 : i32
        %c128_i32_38 = arith.constant 128 : i32
        %61 = arith.muli %60, %c128_i32_38 : i32
        %c128_i32_39 = arith.constant 128 : i32
        %62 = arith.muli %arg1, %c128_i32_39 : i32
        %63 = arith.addi %61, %62 : i32
        %64 = tpu.assume_multiple %63, 128 : i32
        %cst_40 = arith.constant 0.000000e+00 : f32
        %65 = vector.broadcast %cst_40 : f32 to vector<128x128xf32>
        %66 = arith.maximumf %53, %65 : vector<128x128xf32>
        %67 = arith.truncf %66 : vector<128x128xf32> to vector<128x128xbf16>
        %68 = arith.index_cast %64 : i32 to index
        %c0_41 = arith.constant 0 : index
        %69 = vector.load %arg18[%68, %c0_41] : memref<256x128xbf16, #tpu.memory_space<vmem>>, vector<128x128xbf16>
        tpu.vector_store %arg18[%68, %c0_41], %67 {strides = array<i32>} : memref<256x128xbf16, #tpu.memory_space<vmem>>, vector<128x128xbf16>,
      } else {
      }
      %c2_i32_35 = arith.constant 2 : i32
      %57 = arith.cmpi eq, %arg0, %c2_i32_35 : i32
      %58 = arith.extui %57 : i1 to i32
      %c0_i32_36 = arith.constant 0 : i32
      %59 = arith.cmpi ne, %58, %c0_i32_36 : i32
      scf.if %59 {
        %c0_i32_37 = arith.constant 0 : i32
        %60 = arith.cmpi eq, %arg1, %c0_i32_37 : i32
        %61 = arith.extui %60 : i1 to i32
        %c0_i32_38 = arith.constant 0 : i32
        %62 = arith.cmpi ne, %61, %c0_i32_38 : i32
        scf.if %62 {
          %cst_48 = arith.constant 0.000000e+00 : f32
          %71 = vector.broadcast %cst_48 : f32 to vector<8x128xf32>
          %c0_49 = arith.constant 0 : index
          %c0_50 = arith.constant 0 : index
          %72 = vector.load %arg19[%c0_49, %c0_50] : memref<8x128xf32, #tpu.memory_space<vmem>>, vector<8x128xf32>
          tpu.vector_store %arg19[%c0_49, %c0_50], %71 {strides = array<i32>} : memref<8x128xf32, #tpu.memory_space<vmem>>, vector<8x128xf32>,
        } else {
        }
        %c0_39 = arith.constant 0 : index
        %c0_40 = arith.constant 0 : index
        %63 = vector.load %arg19[%c0_39, %c0_40] : memref<8x128xf32, #tpu.memory_space<vmem>>, vector<8x128xf32>
        %c0_41 = arith.constant 0 : index
        %c0_42 = arith.constant 0 : index
        %64 = vector.load %arg5[%c0_41, %c0_42] : memref<8x128xf32, #tpu.memory_space<vmem>>, vector<8x128xf32>
        %cst_43 = arith.constant dense<0.000000e+00> : vector<8x128xf32>
        %65 = tpu.matmul %64, %53, %cst_43 {dimension_numbers = #tpu.dot_dimension_numbers<[1], [0], [0], [1], [0, 0, 1, 1], [], []>} : vector<8x128xf32>, vector<128x128xf32>, vector<8x128xf32> -> vector<8x128xf32>
        %66 = arith.addf %63, %65 : vector<8x128xf32>
        %c0_44 = arith.constant 0 : index
        %c0_45 = arith.constant 0 : index
        %67 = vector.load %arg19[%c0_44, %c0_45] : memref<8x128xf32, #tpu.memory_space<vmem>>, vector<8x128xf32>
        tpu.vector_store %arg19[%c0_44, %c0_45], %66 {strides = array<i32>} : memref<8x128xf32, #tpu.memory_space<vmem>>, vector<8x128xf32>,
        %c0_i32_46 = arith.constant 0 : i32
        %68 = arith.cmpi eq, %arg1, %c0_i32_46 : i32
        %69 = arith.extui %68 : i1 to i32
        %c0_i32_47 = arith.constant 0 : i32
        %70 = arith.cmpi ne, %69, %c0_i32_47 : i32
        scf.if %70 {
          %c0_48 = arith.constant 0 : index
          %c0_49 = arith.constant 0 : index
          %71 = vector.load %arg19[%c0_48, %c0_49] : memref<8x128xf32, #tpu.memory_space<vmem>>, vector<8x128xf32>
          %72 = arith.truncf %71 : vector<8x128xf32> to vector<8x128xbf16>
          %c0_50 = arith.constant 0 : index
          %c0_51 = arith.constant 0 : index
          %73 = vector.load %arg10[%c0_50, %c0_51] : memref<128x128xbf16, #tpu.memory_space<vmem>>, vector<128x128xbf16>
          %cst_52 = arith.constant dense<0.000000e+00> : vector<8x128xf32>
          %74 = tpu.matmul %72, %73, %cst_52 {dimension_numbers = #tpu.dot_dimension_numbers<[1], [0], [0], [1], [0, 0, 1, 1], [], []>} : vector<8x128xbf16>, vector<128x128xbf16>, vector<8x128xf32> -> vector<8x128xf32>
          %c0_53 = arith.constant 0 : index
          %c0_54 = arith.constant 0 : index
          %75 = vector.load %arg11[%c0_53, %c0_54] : memref<1x128xf32, #tpu.memory_space<vmem>>, vector<1x128xf32>
          %76 = vector.broadcast %75 : vector<1x128xf32> to vector<8x128xf32>
          %77 = arith.addf %74, %76 : vector<8x128xf32>
          %cst_55 = arith.constant 0.000000e+00 : f32
          %78 = vector.broadcast %cst_55 : f32 to vector<8x128xf32>
          %79 = arith.maximumf %77, %78 : vector<8x128xf32>
          %80 = arith.truncf %79 : vector<8x128xf32> to vector<8x128xbf16>
          %c0_56 = arith.constant 0 : index
          %c0_57 = arith.constant 0 : index
          %81 = vector.load %arg12[%c0_56, %c0_57] : memref<128x128xbf16, #tpu.memory_space<vmem>>, vector<128x128xbf16>
          %cst_58 = arith.constant dense<0.000000e+00> : vector<8x128xf32>
          %82 = tpu.matmul %80, %81, %cst_58 {dimension_numbers = #tpu.dot_dimension_numbers<[1], [0], [0], [1], [0, 0, 1, 1], [], []>} : vector<8x128xbf16>, vector<128x128xbf16>, vector<8x128xf32> -> vector<8x128xf32>
          %c0_59 = arith.constant 0 : index
          %c0_60 = arith.constant 0 : index
          %83 = vector.load %arg13[%c0_59, %c0_60] : memref<1x128xf32, #tpu.memory_space<vmem>>, vector<1x128xf32>
          %84 = vector.broadcast %83 : vector<1x128xf32> to vector<8x128xf32>
          %85 = arith.addf %82, %84 : vector<8x128xf32>
          %86 = tpu.iota {dimensions = array<i32: 1>} : vector<8x128xi32>
          %c16_i32 = arith.constant 16 : i32
          %87 = vector.broadcast %c16_i32 : i32 to vector<8x128xi32>
          %88 = arith.cmpi slt, %86, %87 : vector<8x128xi32>
          %cst_61 = arith.constant 0.000000e+00 : f32
          %89 = vector.broadcast %cst_61 : f32 to vector<8x128xf32>
          %90 = arith.select %88, %85, %89 : vector<8x128xi1>, vector<8x128xf32>
          %cst_62 = arith.constant dense<0.000000e+00> : vector<8xf32>
          %91 = vector.multi_reduction <add>, %90, %cst_62 [1] : vector<8x128xf32> to vector<8xf32>
          %92 = vector.shape_cast %91 : vector<8xf32> to vector<8x1xf32>
          %cst_63 = arith.constant 6.250000e-02 : f32
          %93 = vector.broadcast %cst_63 : f32 to vector<8x1xf32>
          %94 = arith.mulf %92, %93 : vector<8x1xf32>
          %95 = vector.broadcast %94 : vector<8x1xf32> to vector<8x128xf32>
          %96 = arith.subf %85, %95 : vector<8x128xf32>
          %cst_64 = arith.constant 0.000000e+00 : f32
          %97 = vector.broadcast %cst_64 : f32 to vector<8x128xf32>
          %98 = arith.select %88, %96, %97 : vector<8x128xi1>, vector<8x128xf32>
          %99 = arith.mulf %98, %98 : vector<8x128xf32>
          %cst_65 = arith.constant dense<0.000000e+00> : vector<8xf32>
          %100 = vector.multi_reduction <add>, %99, %cst_65 [1] : vector<8x128xf32> to vector<8xf32>
          %101 = vector.shape_cast %100 : vector<8xf32> to vector<8x1xf32>
          %cst_66 = arith.constant 6.250000e-02 : f32
          %102 = vector.broadcast %cst_66 : f32 to vector<8x1xf32>
          %103 = arith.mulf %101, %102 : vector<8x1xf32>
          %cst_67 = arith.constant 9.99999974E-6 : f32
          %104 = vector.broadcast %cst_67 : f32 to vector<8x1xf32>
          %105 = arith.addf %103, %104 : vector<8x1xf32>
          %106 = math.rsqrt %105 : vector<8x1xf32>
          %107 = vector.broadcast %106 : vector<8x1xf32> to vector<8x128xf32>
          %108 = arith.mulf %98, %107 : vector<8x128xf32>
          %c0_68 = arith.constant 0 : index
          %c0_69 = arith.constant 0 : index
          %109 = vector.load %arg14[%c0_68, %c0_69] : memref<1x128xf32, #tpu.memory_space<vmem>>, vector<1x128xf32>
          %110 = vector.broadcast %109 : vector<1x128xf32> to vector<8x128xf32>
          %111 = arith.mulf %108, %110 : vector<8x128xf32>
          %c0_70 = arith.constant 0 : index
          %c0_71 = arith.constant 0 : index
          %112 = vector.load %arg15[%c0_70, %c0_71] : memref<1x128xf32, #tpu.memory_space<vmem>>, vector<1x128xf32>
          %113 = vector.broadcast %112 : vector<1x128xf32> to vector<8x128xf32>
          %114 = arith.addf %111, %113 : vector<8x128xf32>
          %c0_72 = arith.constant 0 : index
          %c0_73 = arith.constant 0 : index
          %115 = vector.load %arg16[%c0_72, %c0_73] : memref<8x128xf32, #tpu.memory_space<vmem>>, vector<8x128xf32>
          tpu.vector_store %arg16[%c0_72, %c0_73], %114 {strides = array<i32>} : memref<8x128xf32, #tpu.memory_space<vmem>>, vector<8x128xf32>,
        } else {
        }
      } else {
      }
    } else {
    }
    return
  }
  func.func @transform_0(%arg0: i32, %arg1: i32, %arg2: i32) -> (i32, i32) {
    %c0_i32 = arith.constant 0 : i32
    %0 = arith.cmpi eq, %arg0, %c0_i32 : i32
    %c0_i32_0 = arith.constant 0 : i32
    %1 = arith.select %0, %arg1, %c0_i32_0 : i32
    %c0_i32_1 = arith.constant 0 : i32
    %2 = arith.cmpi eq, %arg0, %c0_i32_1 : i32
    %c0_i32_2 = arith.constant 0 : i32
    %3 = arith.select %2, %arg2, %c0_i32_2 : i32
    %c0_i32_3 = arith.constant 0 : i32
    return %1, %3 : i32, i32
  }
  func.func @transform_2(%arg0: i32, %arg1: i32, %arg2: i32) -> (i32, i32) {
    %c2_i32 = arith.constant 2 : i32
    %0 = arith.cmpi eq, %arg0, %c2_i32 : i32
    %c0_i32 = arith.constant 0 : i32
    %1 = arith.select %0, %arg1, %c0_i32 : i32
    %c0_i32_0 = arith.constant 0 : i32
    %c0_i32_1 = arith.constant 0 : i32
    return %c0_i32_0, %1 : i32, i32
  }
  func.func @transform_3(%arg0: i32, %arg1: i32, %arg2: i32) -> (i32, i32, i32) {
    %c0_i32 = arith.constant 0 : i32
    %c0_i32_0 = arith.constant 0 : i32
    %c0_i32_1 = arith.constant 0 : i32
    return %arg0, %c0_i32, %c0_i32_0 : i32, i32, i32
  }
  func.func @transform_4(%arg0: i32, %arg1: i32, %arg2: i32) -> (i32, i32, i32) {
    %c0_i32 = arith.constant 0 : i32
    %c0_i32_0 = arith.constant 0 : i32
    %c0_i32_1 = arith.constant 0 : i32
    return %arg0, %c0_i32, %c0_i32_0 : i32, i32, i32
  }
  func.func @transform_5(%arg0: i32, %arg1: i32, %arg2: i32) -> (i32, i32, i32) {
    %c0_i32 = arith.constant 0 : i32
    %c0_i32_0 = arith.constant 0 : i32
    %c0_i32_1 = arith.constant 0 : i32
    return %arg0, %c0_i32, %c0_i32_0 : i32, i32, i32
  }
  func.func @transform_6(%arg0: i32, %arg1: i32, %arg2: i32) -> (i32, i32, i32) {
    %c0_i32 = arith.constant 0 : i32
    %c0_i32_0 = arith.constant 0 : i32
    %c0_i32_1 = arith.constant 0 : i32
    return %arg0, %c0_i32, %c0_i32_0 : i32, i32, i32
  }
  func.func @transform_7(%arg0: i32, %arg1: i32, %arg2: i32) -> (i32, i32) {
    %c0_i32 = arith.constant 0 : i32
    %c0_i32_0 = arith.constant 0 : i32
    %c0_i32_1 = arith.constant 0 : i32
    return %c0_i32, %c0_i32_0 : i32, i32
  }
  func.func @transform_8(%arg0: i32, %arg1: i32, %arg2: i32) -> (i32, i32) {
    %c0_i32 = arith.constant 0 : i32
    %c0_i32_0 = arith.constant 0 : i32
    %c0_i32_1 = arith.constant 0 : i32
    return %c0_i32, %c0_i32_0 : i32, i32
  }
  func.func @transform_9(%arg0: i32, %arg1: i32, %arg2: i32) -> (i32, i32) {
    %c0_i32 = arith.constant 0 : i32
    %c0_i32_0 = arith.constant 0 : i32
    %c0_i32_1 = arith.constant 0 : i32
    return %c0_i32, %c0_i32_0 : i32, i32
  }
  func.func @transform_10(%arg0: i32, %arg1: i32, %arg2: i32) -> (i32, i32) {
    %c0_i32 = arith.constant 0 : i32
    %c0_i32_0 = arith.constant 0 : i32
    %c0_i32_1 = arith.constant 0 : i32
    return %c0_i32, %c0_i32_0 : i32, i32
  }
  func.func @transform_11(%arg0: i32, %arg1: i32, %arg2: i32) -> (i32, i32) {
    %c0_i32 = arith.constant 0 : i32
    %c0_i32_0 = arith.constant 0 : i32
    %c0_i32_1 = arith.constant 0 : i32
    return %c0_i32, %c0_i32_0 : i32, i32
  }
  func.func @transform_12(%arg0: i32, %arg1: i32, %arg2: i32) -> (i32, i32) {
    %c0_i32 = arith.constant 0 : i32
    %c0_i32_0 = arith.constant 0 : i32
    %c0_i32_1 = arith.constant 0 : i32
    return %c0_i32, %c0_i32_0 : i32, i32
  }
  func.func @transform_13(%arg0: i32, %arg1: i32, %arg2: i32) -> (i32, i32) {
    %c0_i32 = arith.constant 0 : i32
    %c0_i32_0 = arith.constant 0 : i32
    %c0_i32_1 = arith.constant 0 : i32
    return %c0_i32, %c0_i32_0 : i32, i32
  }
}

</mosaic_0001>

<llo_original>
// kernel: tpu_custom_call.1
$region0: #{tpu_custom_call.1}
  #allocation0 [shape = 'u32[]', space=smem, size = 0x4, offset = 0x4, fixed_abs, tag = 'smem constant byte address 0x4 - core index']
  #allocation1 [shape = 'u32[72,128]{1,0:T(1,128)}', space=vmem, size = 0x9000, scoped, tag = 'internal scratch']
  #allocation2 [shape = 'f32[128,128]{1,0:T(8,128)}', space=vmem, size = 0x10000, scoped, tag = 'scratch operand']
  #allocation3 [shape = 'bf16[256,128]{1,0:T(8,128)(2,1)}', space=vmem, size = 0x10000, scoped, tag = 'scratch operand']
  #allocation4 [shape = 'f32[8,128]{1,0:T(8,128)}', space=vmem, size = 0x1000, scoped, tag = 'scratch operand']
  #allocation5 [shape = 'bf16[128,128]{1,0:T(8,128)(2,1)}', space=vmem, size = 0x8000, scoped, tag = 'scratch operand']
  #allocation20 [shape = 's32[]', space=sflag, size = 0x4, offset = 0, fixed_abs, tag = 'sflag constant byte address 0x0 - dummy sync flag']
  #allocation21 [shape = 's32[]', space=sflag, size = 0x4, offset = 0, fixed_abs, tag = 'sflag constant byte address 0x0 - dummy sync flag']
  #allocation22 [shape = 'u32[]', space=smem, size = 0x4, offset = 0x44, fixed_abs, tag = 'smem constant byte address 0x44 - assertion arg 0']
  #allocation23 [shape = 'u32[]', space=smem, size = 0x4, offset = 0x48, fixed_abs, tag = 'smem constant byte address 0x48 - assertion arg 1']
  %s0 = inlined_call_operand.hbm [shape: s8[128,128], index: 0, kind: input, shape index: {}]
  %s1 = inlined_call_operand.hbm [shape: bf16[128,128], index: 1, kind: input, shape index: {}]
  %s2 = inlined_call_operand.hbm [shape: f32[8,128], index: 2, kind: input, shape index: {}]
  %s3 = inlined_call_operand.hbm [shape: bf16[3,128,128], index: 3, kind: input, shape index: {}]
  %s4 = inlined_call_operand.vmem [shape: f32[3,1,128], index: 4, kind: input, shape index: {}]
  %s5 = inlined_call_operand.hbm [shape: bf16[3,128,128], index: 5, kind: input, shape index: {}]
  %s6 = inlined_call_operand.hbm [shape: f32[3,1,128], index: 6, kind: input, shape index: {}]
  %s7 = inlined_call_operand.hbm [shape: bf16[128,128], index: 7, kind: input, shape index: {}]
  %s8 = inlined_call_operand.vmem [shape: f32[1,128], index: 8, kind: input, shape index: {}]
  %s9 = inlined_call_operand.hbm [shape: bf16[128,128], index: 9, kind: input, shape index: {}]
  %s10 = inlined_call_operand.vmem [shape: f32[1,128], index: 10, kind: input, shape index: {}]
  %s11 = inlined_call_operand.vmem [shape: f32[1,128], index: 11, kind: input, shape index: {}]
  %s12 = inlined_call_operand.vmem [shape: f32[1,128], index: 12, kind: input, shape index: {}]
  %s13 = inlined_call_operand.hbm [shape: f32[8,128], index: 13, kind: output, shape index: {}]
  %s14 = sld [smem:[#allocation0]]
  $region146: #{tpu_custom_call.1} parent=0
    _
  %s16 = ssub.s32 1, %s14
  %s17 = scalar_select 0, %s16, %s14
  $region1: #{tpu_custom_call.1} parent=0
    #allocation6 [shape = 'u8[32768]{0}', space=vmem, size = 0x8000, scoped, tag = 'input window, operand 0']
    #allocation7 [shape = 's32[2]{0}', space=sflag, size = 0x8, scoped, tag = 'scoped memory for tpu_custom_call.1']
    #allocation8 [shape = 's32[2]{0}', space=sflag, size = 0x8, scoped, tag = 'scoped memory for tpu_custom_call.1']
    #allocation9 [shape = 'u8[8192]{0}', space=vmem, size = 0x2000, scoped, tag = 'input window, operand 2']
    #allocation10 [shape = 's32[2]{0}', space=sflag, size = 0x8, scoped, tag = 'scoped memory for tpu_custom_call.1']
    #allocation11 [shape = 'u8[65536]{0}', space=vmem, size = 0x10000, scoped, tag = 'input window, operand 3']
    #allocation12 [shape = 'u8[65536]{0}', space=vmem, size = 0x10000, scoped, tag = 'input window, operand 5']
    #allocation13 [shape = 's32[2]{0}', space=sflag, size = 0x8, scoped, tag = 'scoped memory for tpu_custom_call.1']
    #allocation14 [shape = 'u8[1024]{0}', space=vmem, size = 0x400, scoped, tag = 'input window, operand 6']
    #allocation15 [shape = 'u8[32768]{0}', space=vmem, size = 0x8000, scoped, tag = 'input window, operand 7, single buffered']
    #allocation16 [shape = 's32[1]{0}', space=sflag, size = 0x4, scoped, tag = 'scoped memory for tpu_custom_call.1']
    #allocation17 [shape = 'u8[32768]{0}', space=vmem, size = 0x8000, scoped, tag = 'input window, operand 9, single buffered']
    #allocation18 [shape = 'u8[4096]{0}', space=vmem, size = 0x1000, scoped, tag = 'output window, operand 0, single buffered']
    %18 = vsyncpa [#allocation7], 0
    %s19 = scalar_lea.sflag [#allocation7], 1
    %20 = vsyncpa %s19, 0
    %21 = vsyncpa [#allocation10], 0
    %s22 = scalar_lea.sflag [#allocation10], 1
    %23 = vsyncpa %s22, 0
    %24 = vsyncpa [#allocation13], 0
    %s25 = scalar_lea.sflag [#allocation13], 1
    %26 = vsyncpa %s25, 0
    %27 = vsyncpa [#allocation16], 0
    %28 = vsyncpa [#allocation8], 0
    loop: start=0, step=1, limit=5
    $region2: #{tpu_custom_call.1} parent=1 // loop_pre_header
      _
    $region3: #{tpu_custom_call.1} parent=1 // loop_header
      %s30 = sphi 0, %s34
      %p31 = scmp.ge.s32.totalorder %s30, 5
      %s37 = sphi 0, %s56
      %s38 = sphi 0, %s52
      %s39 = sphi 0, %s48
      %s40 = sphi 0, %s37
      %s41 = sphi 0, %s38
      %s42 = sphi 0, %s39
      %s43 = sphi 0, %s40
      %s44 = sphi 0, %s41
      %s45 = sphi 0, %s42
      %s67 = sphi 0, %s69
      %s70 = sphi 0, %s67
      %s71 = sphi 0, %s70
      %s87 = sphi 0, %s71
      %s97 = sphi 0, %s99
      %s100 = sphi 0, %s97
      %s101 = sphi 0, %s100
      %s117 = sphi 0, %s101
      %s123 = sphi 0, %s125
      %s126 = sphi 0, %s123
      %s127 = sphi 0, %s126
      %s143 = sphi 0, %s127
      %s149 = sphi 0, %s151
      %s152 = sphi 0, %s149
      %s153 = sphi 0, %s152
      %s169 = sphi 0, %s153
      %s175 = sphi 0, %s177
      %s178 = sphi 0, %s175
      %s179 = sphi 0, %s178
      %s195 = sphi 0, %s179
      %s201 = sphi 0, %s203
      %s204 = sphi 0, %s201
      %s205 = sphi 0, %s204
      %s221 = sphi 0, %s205
      %s225 = sphi 0, %s225
      %s227 = sphi 0, %s225
      %s228 = sphi 0, %s227
      %s242 = sphi 0, %s228
      %s246 = sphi 0, %s246
      %s248 = sphi 0, %s246
      %s249 = sphi 0, %s248
      %s263 = sphi 0, %s249
      %s267 = sphi 0, %s267
      %s269 = sphi 0, %s267
      %s270 = sphi 0, %s269
      %s284 = sphi 0, %s270
      %s288 = sphi 0, %s288
      %s290 = sphi 0, %s288
      %s291 = sphi 0, %s290
      %s305 = sphi 0, %s291
      %s309 = sphi 0, %s309
      %s311 = sphi 0, %s309
      %s312 = sphi 0, %s311
      %s326 = sphi 0, %s312
      %s330 = sphi 0, %s330
      %s332 = sphi 0, %s330
      %s333 = sphi 0, %s332
      %s347 = sphi 0, %s333
      %s351 = sphi 0, %s351
      %s353 = sphi 0, %s351
      %s354 = sphi 0, %s353
      %s368 = sphi 0, %s354
    $region4: #{tpu_custom_call.1} parent=1 // loop_header_branch
      %33 = sbr.rel (%p31) target = $region8
    $region5: #{tpu_custom_call.1} parent=1 // loop_body
      %s35 = ssub.s32 %s30, 1
      %s36 = ssub.s32 %s30, 2
      %s46 = sadd.s32 1, %s39
      %p47 = scmp.ge.s32.totalorder %s46, 1
      %s48 = scalar_select %p47, 0, %s46
      %s49 = sadd.s32 1, %s38
      %s50 = scalar_select %p47, %s49, %s38
      %p51 = scmp.ge.s32.totalorder %s50, 1
      %s52 = scalar_select %p51, 0, %s50
      %s53 = sadd.s32 1, %s37
      %s54 = scalar_select %p51, %s53, %s37
      %p55 = scmp.ge.s32.totalorder %s54, 3
      %s56 = scalar_select %p55, 0, %s54
      %p57 = scmp.eq.s32.totalorder %s37, 0
      %s58 = scalar_select %p57, %s38, 0
      %s59 = scalar_select %p57, %s39, 0
      %p60 = scmp.eq.s32.totalorder %s56, 0
      %s61 = scalar_select %p60, %s52, 0
      %s62 = scalar_select %p60, %s48, 0
      %s63 = ssub.s32 %s58, %s61
      %s64 = ssub.s32 %s59, %s62
      %s65 = sor.u32 %s63, %s64
      %p66 = scmp.eq.s32.totalorder %s65, 0
      %s68 = sadd.s32 %s67, 1
      %s69 = scalar_select %p66, %s67, %s68
      %p72 = pneg %p66
      %p73 = scmp.eq.s32.totalorder %s30, 2
      %p74 = por %p72, %p73
      %p75 = scmp.ne.s32.totalorder %s67, %s70
      %p76 = scmp.eq.s32.totalorder %s30, 0
      %p77 = por %p75, %p76
      %p78 = scmp.ne.s32.totalorder %s67, %s70
      %p79 = scmp.eq.s32.totalorder %s35, 2
      %p80 = por %p78, %p79
      %p81 = scmp.ne.s32.totalorder %s70, %s71
      %p82 = scmp.eq.s32.totalorder %s35, 0
      %p83 = por %p81, %p82
      %p84 = scmp.ne.s32.totalorder %s70, %s71
      %p85 = scmp.eq.s32.totalorder %s36, 2
      %p86 = por %p84, %p85
      %p88 = scmp.ne.s32.totalorder %s71, %s87
      %p89 = scmp.eq.s32.totalorder %s36, 0
      %p90 = por %p88, %p89
      %p91 = scmp.eq.s32.totalorder %s37, 2
      %s92 = scalar_select %p91, %s38, 0
      %p93 = scmp.eq.s32.totalorder %s56, 2
      %s94 = scalar_select %p93, %s52, 0
      %s95 = ssub.s32 %s92, %s94
      %p96 = scmp.eq.s32.totalorder %s95, 0
      %s98 = sadd.s32 %s97, 1
      %s99 = scalar_select %p96, %s97, %s98
      %p102 = pneg %p96
      %p103 = scmp.eq.s32.totalorder %s30, 2
      %p104 = por %p102, %p103
      %p105 = scmp.ne.s32.totalorder %s97, %s100
      %p106 = scmp.eq.s32.totalorder %s30, 0
      %p107 = por %p105, %p106
      %p108 = scmp.ne.s32.totalorder %s97, %s100
      %p109 = scmp.eq.s32.totalorder %s35, 2
      %p110 = por %p108, %p109
      %p111 = scmp.ne.s32.totalorder %s100, %s101
      %p112 = scmp.eq.s32.totalorder %s35, 0
      %p113 = por %p111, %p112
      %p114 = scmp.ne.s32.totalorder %s100, %s101
      %p115 = scmp.eq.s32.totalorder %s36, 2
      %p116 = por %p114, %p115
      %p118 = scmp.ne.s32.totalorder %s101, %s117
      %p119 = scmp.eq.s32.totalorder %s36, 0
      %p120 = por %p118, %p119
      %s121 = ssub.s32 %s37, %s56
      %p122 = scmp.eq.s32.totalorder %s121, 0
      %s124 = sadd.s32 %s123, 1
      %s125 = scalar_select %p122, %s123, %s124
      %p128 = pneg %p122
      %p129 = scmp.eq.s32.totalorder %s30, 2
      %p130 = por %p128, %p129
      %p131 = scmp.ne.s32.totalorder %s123, %s126
      %p132 = scmp.eq.s32.totalorder %s30, 0
      %p133 = por %p131, %p132
      %p134 = scmp.ne.s32.totalorder %s123, %s126
      %p135 = scmp.eq.s32.totalorder %s35, 2
      %p136 = por %p134, %p135
      %p137 = scmp.ne.s32.totalorder %s126, %s127
      %p138 = scmp.eq.s32.totalorder %s35, 0
      %p139 = por %p137, %p138
      %p140 = scmp.ne.s32.totalorder %s126, %s127
      %p141 = scmp.eq.s32.totalorder %s36, 2
      %p142 = por %p140, %p141
      %p144 = scmp.ne.s32.totalorder %s127, %s143
      %p145 = scmp.eq.s32.totalorder %s36, 0
      %p146 = por %p144, %p145
      %s147 = ssub.s32 %s37, %s56
      %p148 = scmp.eq.s32.totalorder %s147, 0
      %s150 = sadd.s32 %s149, 1
      %s151 = scalar_select %p148, %s149, %s150
      %p154 = pneg %p148
      %p155 = scmp.eq.s32.totalorder %s30, 2
      %p156 = por %p154, %p155
      %p157 = scmp.ne.s32.totalorder %s149, %s152
      %p158 = scmp.eq.s32.totalorder %s30, 0
      %p159 = por %p157, %p158
      %p160 = scmp.ne.s32.totalorder %s149, %s152
      %p161 = scmp.eq.s32.totalorder %s35, 2
      %p162 = por %p160, %p161
      %p163 = scmp.ne.s32.totalorder %s152, %s153
      %p164 = scmp.eq.s32.totalorder %s35, 0
      %p165 = por %p163, %p164
      %p166 = scmp.ne.s32.totalorder %s152, %s153
      %p167 = scmp.eq.s32.totalorder %s36, 2
      %p168 = por %p166, %p167
      %p170 = scmp.ne.s32.totalorder %s153, %s169
      %p171 = scmp.eq.s32.totalorder %s36, 0
      %p172 = por %p170, %p171
      %s173 = ssub.s32 %s37, %s56
      %p174 = scmp.eq.s32.totalorder %s173, 0
      %s176 = sadd.s32 %s175, 1
      %s177 = scalar_select %p174, %s175, %s176
      %p180 = pneg %p174
      %p181 = scmp.eq.s32.totalorder %s30, 2
      %p182 = por %p180, %p181
      %p183 = scmp.ne.s32.totalorder %s175, %s178
      %p184 = scmp.eq.s32.totalorder %s30, 0
      %p185 = por %p183, %p184
      %p186 = scmp.ne.s32.totalorder %s175, %s178
      %p187 = scmp.eq.s32.totalorder %s35, 2
      %p188 = por %p186, %p187
      %p189 = scmp.ne.s32.totalorder %s178, %s179
      %p190 = scmp.eq.s32.totalorder %s35, 0
      %p191 = por %p189, %p190
      %p192 = scmp.ne.s32.totalorder %s178, %s179
      %p193 = scmp.eq.s32.totalorder %s36, 2
      %p194 = por %p192, %p193
      %p196 = scmp.ne.s32.totalorder %s179, %s195
      %p197 = scmp.eq.s32.totalorder %s36, 0
      %p198 = por %p196, %p197
      %s199 = ssub.s32 %s37, %s56
      %p200 = scmp.eq.s32.totalorder %s199, 0
      %s202 = sadd.s32 %s201, 1
      %s203 = scalar_select %p200, %s201, %s202
      %p206 = pneg %p200
      %p207 = scmp.eq.s32.totalorder %s30, 2
      %p208 = por %p206, %p207
      %p209 = scmp.ne.s32.totalorder %s201, %s204
      %p210 = scmp.eq.s32.totalorder %s30, 0
      %p211 = por %p209, %p210
      %p212 = scmp.ne.s32.totalorder %s201, %s204
      %p213 = scmp.eq.s32.totalorder %s35, 2
      %p214 = por %p212, %p213
      %p215 = scmp.ne.s32.totalorder %s204, %s205
      %p216 = scmp.eq.s32.totalorder %s35, 0
      %p217 = por %p215, %p216
      %p218 = scmp.ne.s32.totalorder %s204, %s205
      %p219 = scmp.eq.s32.totalorder %s36, 2
      %p220 = por %p218, %p219
      %p222 = scmp.ne.s32.totalorder %s205, %s221
      %p223 = scmp.eq.s32.totalorder %s36, 0
      %p224 = por %p222, %p223
      %s226 = sadd.s32 %s225, 1
      %p229 = scmp.eq.s32.totalorder %s30, 2
      %p230 = scmp.ne.s32.totalorder %s225, %s227
      %p231 = scmp.eq.s32.totalorder %s30, 0
      %p232 = por %p230, %p231
      %p233 = scmp.ne.s32.totalorder %s225, %s227
      %p234 = scmp.eq.s32.totalorder %s35, 2
      %p235 = por %p233, %p234
      %p236 = scmp.ne.s32.totalorder %s227, %s228
      %p237 = scmp.eq.s32.totalorder %s35, 0
      %p238 = por %p236, %p237
      %p239 = scmp.ne.s32.totalorder %s227, %s228
      %p240 = scmp.eq.s32.totalorder %s36, 2
      %p241 = por %p239, %p240
      %p243 = scmp.ne.s32.totalorder %s228, %s242
      %p244 = scmp.eq.s32.totalorder %s36, 0
      %p245 = por %p243, %p244
      %s247 = sadd.s32 %s246, 1
      %p250 = scmp.eq.s32.totalorder %s30, 2
      %p251 = scmp.ne.s32.totalorder %s246, %s248
      %p252 = scmp.eq.s32.totalorder %s30, 0
      %p253 = por %p251, %p252
      %p254 = scmp.ne.s32.totalorder %s246, %s248
      %p255 = scmp.eq.s32.totalorder %s35, 2
      %p256 = por %p254, %p255
      %p257 = scmp.ne.s32.totalorder %s248, %s249
      %p258 = scmp.eq.s32.totalorder %s35, 0
      %p259 = por %p257, %p258
      %p260 = scmp.ne.s32.totalorder %s248, %s249
      %p261 = scmp.eq.s32.totalorder %s36, 2
      %p262 = por %p260, %p261
      %p264 = scmp.ne.s32.totalorder %s249, %s263
      %p265 = scmp.eq.s32.totalorder %s36, 0
      %p266 = por %p264, %p265
      %s268 = sadd.s32 %s267, 1
      %p271 = scmp.eq.s32.totalorder %s30, 2
      %p272 = scmp.ne.s32.totalorder %s267, %s269
      %p273 = scmp.eq.s32.totalorder %s30, 0
      %p274 = por %p272, %p273
      %p275 = scmp.ne.s32.totalorder %s267, %s269
      %p276 = scmp.eq.s32.totalorder %s35, 2
      %p277 = por %p275, %p276
      %p278 = scmp.ne.s32.totalorder %s269, %s270
      %p279 = scmp.eq.s32.totalorder %s35, 0
      %p280 = por %p278, %p279
      %p281 = scmp.ne.s32.totalorder %s269, %s270
      %p282 = scmp.eq.s32.totalorder %s36, 2
      %p283 = por %p281, %p282
      %p285 = scmp.ne.s32.totalorder %s270, %s284
      %p286 = scmp.eq.s32.totalorder %s36, 0
      %p287 = por %p285, %p286
      %s289 = sadd.s32 %s288, 1
      %p292 = scmp.eq.s32.totalorder %s30, 2
      %p293 = scmp.ne.s32.totalorder %s288, %s290
      %p294 = scmp.eq.s32.totalorder %s30, 0
      %p295 = por %p293, %p294
      %p296 = scmp.ne.s32.totalorder %s288, %s290
      %p297 = scmp.eq.s32.totalorder %s35, 2
      %p298 = por %p296, %p297
      %p299 = scmp.ne.s32.totalorder %s290, %s291
      %p300 = scmp.eq.s32.totalorder %s35, 0
      %p301 = por %p299, %p300
      %p302 = scmp.ne.s32.totalorder %s290, %s291
      %p303 = scmp.eq.s32.totalorder %s36, 2
      %p304 = por %p302, %p303
      %p306 = scmp.ne.s32.totalorder %s291, %s305
      %p307 = scmp.eq.s32.totalorder %s36, 0
      %p308 = por %p306, %p307
      %s310 = sadd.s32 %s309, 1
      %p313 = scmp.eq.s32.totalorder %s30, 2
      %p314 = scmp.ne.s32.totalorder %s309, %s311
      %p315 = scmp.eq.s32.totalorder %s30, 0
      %p316 = por %p314, %p315
      %p317 = scmp.ne.s32.totalorder %s309, %s311
      %p318 = scmp.eq.s32.totalorder %s35, 2
      %p319 = por %p317, %p318
      %p320 = scmp.ne.s32.totalorder %s311, %s312
      %p321 = scmp.eq.s32.totalorder %s35, 0
      %p322 = por %p320, %p321
      %p323 = scmp.ne.s32.totalorder %s311, %s312
      %p324 = scmp.eq.s32.totalorder %s36, 2
      %p325 = por %p323, %p324
      %p327 = scmp.ne.s32.totalorder %s312, %s326
      %p328 = scmp.eq.s32.totalorder %s36, 0
      %p329 = por %p327, %p328
      %s331 = sadd.s32 %s330, 1
      %p334 = scmp.eq.s32.totalorder %s30, 2
      %p335 = scmp.ne.s32.totalorder %s330, %s332
      %p336 = scmp.eq.s32.totalorder %s30, 0
      %p337 = por %p335, %p336
      %p338 = scmp.ne.s32.totalorder %s330, %s332
      %p339 = scmp.eq.s32.totalorder %s35, 2
      %p340 = por %p338, %p339
      %p341 = scmp.ne.s32.totalorder %s332, %s333
      %p342 = scmp.eq.s32.totalorder %s35, 0
      %p343 = por %p341, %p342
      %p344 = scmp.ne.s32.totalorder %s332, %s333
      %p345 = scmp.eq.s32.totalorder %s36, 2
      %p346 = por %p344, %p345
      %p348 = scmp.ne.s32.totalorder %s333, %s347
      %p349 = scmp.eq.s32.totalorder %s36, 0
      %p350 = por %p348, %p349
      %s352 = sadd.s32 %s351, 1
      %p355 = scmp.eq.s32.totalorder %s30, 2
      %p356 = scmp.ne.s32.totalorder %s351, %s353
      %p357 = scmp.eq.s32.totalorder %s30, 0
      %p358 = por %p356, %p357
      %p359 = scmp.ne.s32.totalorder %s351, %s353
      %p360 = scmp.eq.s32.totalorder %s35, 2
      %p361 = por %p359, %p360
      %p362 = scmp.ne.s32.totalorder %s353, %s354
      %p363 = scmp.eq.s32.totalorder %s35, 0
      %p364 = por %p362, %p363
      %p365 = scmp.ne.s32.totalorder %s353, %s354
      %p366 = scmp.eq.s32.totalorder %s36, 2
      %p367 = por %p365, %p366
      %p369 = scmp.ne.s32.totalorder %s354, %s368
      %p370 = scmp.eq.s32.totalorder %s36, 0
      %p371 = por %p369, %p370
      %p372 = scmp.le.s32.totalorder 1, %s30
      %p373 = scmp.lt.s32.totalorder %s30, 4
      %p374 = pnand %p372, %p373
      %p375 = pneg %p374
      // Predicated region
      $region9: #{tpu_custom_call.1} parent=5 // pred_check
        _
      $region10: #{tpu_custom_call.1} parent=5 // pred_check_branch
        %377 = sbr.rel (%p374) target = $region12
      $region11: #{tpu_custom_call.1} parent=5 // pred_region
        %s378 = ssub.s32 %s30, 1
        // Predicated region
        $region13: #{tpu_custom_call.1} parent=11 // pred_check
          %p379 = pneg %p238
        $region14: #{tpu_custom_call.1} parent=11 // pred_check_branch
          %381 = sbr.rel (%p379) target = $region16
        $region15: #{tpu_custom_call.1} parent=11 // pred_region
          %383 = vsyncadd [#allocation16], 0
          %s384 = sshll.u32 %s7, 4
          %s385 = int_to_ptr.hbm [resolvable:$true] %s384
          %s386 = sshll.u32 [#allocation15], 4
          %s387 = int_to_ptr.vmem [resolvable:$true] %s386
          %392 = dma.hbm_to_vmem [thread:$0]  %s385, 1024, %s387, [#allocation16], 64, 64, 4
        $region16: #{tpu_custom_call.1} parent=11 // pred_fallthru
          _
        // Predicated region
        $region17: #{tpu_custom_call.1} parent=11 // pred_check
          %p393 = pneg %p259
        $region18: #{tpu_custom_call.1} parent=11 // pred_check_branch
          %395 = sbr.rel (%p393) target = $region20
        $region19: #{tpu_custom_call.1} parent=11 // pred_region
          _
        $region20: #{tpu_custom_call.1} parent=11 // pred_fallthru
          _
        // Predicated region
        $region21: #{tpu_custom_call.1} parent=11 // pred_check
          %p396 = pneg %p280
        $region22: #{tpu_custom_call.1} parent=11 // pred_check_branch
          %398 = sbr.rel (%p396) target = $region24
        $region23: #{tpu_custom_call.1} parent=11 // pred_region
          %400 = vsyncadd [#allocation16], 0
          %s401 = sshll.u32 %s9, 4
          %s402 = int_to_ptr.hbm [resolvable:$true] %s401
          %s403 = sshll.u32 [#allocation17], 4
          %s404 = int_to_ptr.vmem [resolvable:$true] %s403
          %409 = dma.hbm_to_vmem [thread:$0]  %s402, 1024, %s404, [#allocation16], 64, 64, 4
        $region24: #{tpu_custom_call.1} parent=11 // pred_fallthru
          _
        // Predicated region
        $region25: #{tpu_custom_call.1} parent=11 // pred_check
          %p410 = pneg %p301
        $region26: #{tpu_custom_call.1} parent=11 // pred_check_branch
          %412 = sbr.rel (%p410) target = $region28
        $region27: #{tpu_custom_call.1} parent=11 // pred_region
          _
        $region28: #{tpu_custom_call.1} parent=11 // pred_fallthru
          _
        // Predicated region
        $region29: #{tpu_custom_call.1} parent=11 // pred_check
          %p413 = pneg %p322
        $region30: #{tpu_custom_call.1} parent=11 // pred_check_branch
          %415 = sbr.rel (%p413) target = $region32
        $region31: #{tpu_custom_call.1} parent=11 // pred_region
          _
        $region32: #{tpu_custom_call.1} parent=11 // pred_fallthru
          _
        // Predicated region
        $region33: #{tpu_custom_call.1} parent=11 // pred_check
          %p416 = pneg %p343
        $region34: #{tpu_custom_call.1} parent=11 // pred_check_branch
          %418 = sbr.rel (%p416) target = $region36
        $region35: #{tpu_custom_call.1} parent=11 // pred_region
          _
        $region36: #{tpu_custom_call.1} parent=11 // pred_fallthru
          _
      $region12: #{tpu_custom_call.1} parent=5 // pred_fallthru
        _
      %p419 = scmp.lt.s32.totalorder %s30, 3
      // Predicated region
      $region37: #{tpu_custom_call.1} parent=5 // pred_check
        %p420 = pneg %p419
      $region38: #{tpu_custom_call.1} parent=5 // pred_check_branch
        %422 = sbr.rel (%p420) target = $region40
      $region39: #{tpu_custom_call.1} parent=5 // pred_region
        // Predicated region
        $region41: #{tpu_custom_call.1} parent=39 // pred_check
          %p423 = pneg %p77
        $region42: #{tpu_custom_call.1} parent=39 // pred_check_branch
          %425 = sbr.rel (%p423) target = $region44
        $region43: #{tpu_custom_call.1} parent=39 // pred_region
          %s426 = sand.u32 %s67, 1
          %s427 = scalar_lea.sflag [#allocation7], %s426
          %s428 = sand.u32 %s67, 1
          %s429 = smul.addr %s428, 32
          %s430 = scalar_lea.vmem [#allocation6], %s429
          %p431 = scmp.eq.s32.totalorder %s37, 0
          %s432 = scalar_select %p431, %s38, 0
          %s433 = scalar_select %p431, %s39, 0
          %s434 = smul.u32 4, %s432
          %436 = vsyncadd %s427, 0
          %s437 = sadd.s32 %s433, %s434
          %s438 = smul.addr %s437, 8
          %s439 = scalar_lea.hbm %s0, %s438
          %s440 = sshll.u32 %s439, 4
          %s441 = int_to_ptr.hbm [resolvable:$true] %s440
          %s442 = sshll.u32 %s430, 4
          %s443 = int_to_ptr.vmem [resolvable:$true] %s442
          %448 = dma.hbm_to_vmem [thread:$0]  %s441, 512, %s443, %s427, 128, 128, 8
        $region44: #{tpu_custom_call.1} parent=39 // pred_fallthru
          _
        // Predicated region
        $region45: #{tpu_custom_call.1} parent=39 // pred_check
          %p449 = pneg %p107
        $region46: #{tpu_custom_call.1} parent=39 // pred_check_branch
          %451 = sbr.rel (%p449) target = $region48
        $region47: #{tpu_custom_call.1} parent=39 // pred_region
          %s452 = sand.u32 %s30, 1
          %s453 = scalar_lea.sflag [#allocation10], %s452
          %s454 = sand.u32 %s97, 1
          %s455 = smul.addr %s454, 8
          %s456 = scalar_lea.vmem [#allocation9], %s455
          %p457 = scmp.eq.s32.totalorder %s37, 2
          %s458 = scalar_select %p457, %s38, 0
          %460 = vsyncadd %s453, 0
          %s461 = smul.addr %s458, 8
          %s462 = scalar_lea.hbm %s2, %s461
          %s464 = sshll.u32 %s462, 4
          %s465 = int_to_ptr.hbm [resolvable:$true] %s464
          %s466 = sshll.u32 %s456, 4
          %s467 = int_to_ptr.vmem [resolvable:$true] %s466
          %469 = dma.hbm_to_vmem [thread:$0]  %s465, 128, %s467, %s453
        $region48: #{tpu_custom_call.1} parent=39 // pred_fallthru
          _
        // Predicated region
        $region49: #{tpu_custom_call.1} parent=39 // pred_check
          %p470 = pneg %p133
        $region50: #{tpu_custom_call.1} parent=39 // pred_check_branch
          %472 = sbr.rel (%p470) target = $region52
        $region51: #{tpu_custom_call.1} parent=39 // pred_region
          %s473 = sand.u32 %s30, 1
          %s474 = scalar_lea.sflag [#allocation10], %s473
          %s475 = sand.u32 %s123, 1
          %s476 = smul.addr %s475, 64
          %s477 = scalar_lea.vmem [#allocation11], %s476
          %479 = vsyncadd %s474, 0
          %s480 = smul.addr %s37, 16
          %s481 = smul.addr %s480, 4
          %s482 = scalar_lea.hbm %s3, %s481
          %s483 = sshll.u32 %s482, 4
          %s484 = int_to_ptr.hbm [resolvable:$true] %s483
          %s485 = sshll.u32 %s477, 4
          %s486 = int_to_ptr.vmem [resolvable:$true] %s485
          %491 = dma.hbm_to_vmem [thread:$0]  %s484, 1024, %s486, %s474, 64, 64, 4
        $region52: #{tpu_custom_call.1} parent=39 // pred_fallthru
          _
        // Predicated region
        $region53: #{tpu_custom_call.1} parent=39 // pred_check
          %p492 = pneg %p159
        $region54: #{tpu_custom_call.1} parent=39 // pred_check_branch
          %494 = sbr.rel (%p492) target = $region56
        $region55: #{tpu_custom_call.1} parent=39 // pred_region
          %p495 = scmp.lt.s32.totalorder %s37, 2
          %s496 = scalar_select %p495, %s37, 2
          %s497 = scalar_lea.vmem %s4, %s496
        $region56: #{tpu_custom_call.1} parent=39 // pred_fallthru
          _
        // Predicated region
        $region57: #{tpu_custom_call.1} parent=39 // pred_check
          %p498 = pneg %p185
        $region58: #{tpu_custom_call.1} parent=39 // pred_check_branch
          %500 = sbr.rel (%p498) target = $region60
        $region59: #{tpu_custom_call.1} parent=39 // pred_region
          %s501 = sand.u32 %s30, 1
          %s502 = scalar_lea.sflag [#allocation13], %s501
          %s503 = sand.u32 %s175, 1
          %s504 = smul.addr %s503, 64
          %s505 = scalar_lea.vmem [#allocation12], %s504
          %507 = vsyncadd %s502, 0
          %s508 = smul.addr %s37, 16
          %s509 = smul.addr %s508, 4
          %s510 = scalar_lea.hbm %s5, %s509
          %s511 = sshll.u32 %s510, 4
          %s512 = int_to_ptr.hbm [resolvable:$true] %s511
          %s513 = sshll.u32 %s505, 4
          %s514 = int_to_ptr.vmem [resolvable:$true] %s513
          %519 = dma.hbm_to_vmem [thread:$0]  %s512, 1024, %s514, %s502, 64, 64, 4
        $region60: #{tpu_custom_call.1} parent=39 // pred_fallthru
          _
        // Predicated region
        $region61: #{tpu_custom_call.1} parent=39 // pred_check
          %p520 = pneg %p211
        $region62: #{tpu_custom_call.1} parent=39 // pred_check_branch
          %522 = sbr.rel (%p520) target = $region64
        $region63: #{tpu_custom_call.1} parent=39 // pred_region
          %s523 = sand.u32 %s30, 1
          %s524 = scalar_lea.sflag [#allocation13], %s523
          %s525 = sand.u32 %s201, 1
          %s526 = scalar_lea.vmem [#allocation14], %s525
          %528 = vsyncadd %s524, 0
          %s529 = scalar_lea.hbm %s6, %s37
          %s531 = sshll.u32 %s529, 4
          %s532 = int_to_ptr.hbm [resolvable:$true] %s531
          %s533 = sshll.u32 %s526, 4
          %s534 = int_to_ptr.vmem [resolvable:$true] %s533
          %536 = dma.hbm_to_vmem [thread:$0]  %s532, 16, %s534, %s524
        $region64: #{tpu_custom_call.1} parent=39 // pred_fallthru
          _
      $region40: #{tpu_custom_call.1} parent=5 // pred_fallthru
        _
      %p537 = scmp.le.s32.totalorder 1, %s30
      %p538 = scmp.lt.s32.totalorder %s30, 4
      %p539 = pnand %p537, %p538
      %p540 = pneg %p539
      // Predicated region
      $region65: #{tpu_custom_call.1} parent=5 // pred_check
        _
      $region66: #{tpu_custom_call.1} parent=5 // pred_check_branch
        %542 = sbr.rel (%p539) target = $region68
      $region67: #{tpu_custom_call.1} parent=5 // pred_region
        %s543 = ssub.s32 %s30, 1
        %s544 = sand.u32 %s70, 1
        %s545 = scalar_lea.sflag [#allocation7], %s544
        %s546 = sand.u32 %s70, 1
        %s547 = smul.addr %s546, 32
        %s548 = scalar_lea.vmem [#allocation6], %s547
        // Predicated region
        $region69: #{tpu_custom_call.1} parent=67 // pred_check
          %p549 = pneg %p83
        $region70: #{tpu_custom_call.1} parent=67 // pred_check_branch
          %551 = sbr.rel (%p549) target = $region72
        $region71: #{tpu_custom_call.1} parent=67 // pred_region
          %553 = dma.done %s545, 512
        $region72: #{tpu_custom_call.1} parent=67 // pred_fallthru
          _
        %s554 = sand.u32 %s35, 1
        %s555 = scalar_lea.sflag [#allocation10], %s554
        %s556 = sand.u32 %s100, 1
        %s557 = smul.addr %s556, 8
        %s558 = scalar_lea.vmem [#allocation9], %s557
        // Predicated region
        $region73: #{tpu_custom_call.1} parent=67 // pred_check
          %p559 = pneg %p113
        $region74: #{tpu_custom_call.1} parent=67 // pred_check_branch
          %561 = sbr.rel (%p559) target = $region76
        $region75: #{tpu_custom_call.1} parent=67 // pred_region
          %563 = dma.done %s555, 128
        $region76: #{tpu_custom_call.1} parent=67 // pred_fallthru
          _
        %s564 = sand.u32 %s35, 1
        %s565 = scalar_lea.sflag [#allocation10], %s564
        %s566 = sand.u32 %s126, 1
        %s567 = smul.addr %s566, 64
        %s568 = scalar_lea.vmem [#allocation11], %s567
        // Predicated region
        $region77: #{tpu_custom_call.1} parent=67 // pred_check
          %p569 = pneg %p139
        $region78: #{tpu_custom_call.1} parent=67 // pred_check_branch
          %571 = sbr.rel (%p569) target = $region80
        $region79: #{tpu_custom_call.1} parent=67 // pred_region
          %573 = dma.done %s565, 1024
        $region80: #{tpu_custom_call.1} parent=67 // pred_fallthru
          _
        %s574 = sand.u32 %s35, 1
        %s575 = scalar_lea.sflag [#allocation13], %s574
        %s576 = sand.u32 %s178, 1
        %s577 = smul.addr %s576, 64
        %s578 = scalar_lea.vmem [#allocation12], %s577
        // Predicated region
        $region81: #{tpu_custom_call.1} parent=67 // pred_check
          %p579 = pneg %p191
        $region82: #{tpu_custom_call.1} parent=67 // pred_check_branch
          %581 = sbr.rel (%p579) target = $region84
        $region83: #{tpu_custom_call.1} parent=67 // pred_region
          %583 = dma.done %s575, 1024
        $region84: #{tpu_custom_call.1} parent=67 // pred_fallthru
          _
        %s584 = sand.u32 %s35, 1
        %s585 = scalar_lea.sflag [#allocation13], %s584
        %s586 = sand.u32 %s204, 1
        %s587 = scalar_lea.vmem [#allocation14], %s586
        // Predicated region
        $region85: #{tpu_custom_call.1} parent=67 // pred_check
          %p588 = pneg %p217
        $region86: #{tpu_custom_call.1} parent=67 // pred_check_branch
          %590 = sbr.rel (%p588) target = $region88
        $region87: #{tpu_custom_call.1} parent=67 // pred_region
          %592 = dma.done %s585, 16
        $region88: #{tpu_custom_call.1} parent=67 // pred_fallthru
          _
        // Predicated region
        $region89: #{tpu_custom_call.1} parent=67 // pred_check
          %p593 = pneg %p238
        $region90: #{tpu_custom_call.1} parent=67 // pred_check_branch
          %595 = sbr.rel (%p593) target = $region92
        $region91: #{tpu_custom_call.1} parent=67 // pred_region
          %597 = dma.done [#allocation16], 1024
        $region92: #{tpu_custom_call.1} parent=67 // pred_fallthru
          _
        // Predicated region
        $region93: #{tpu_custom_call.1} parent=67 // pred_check
          %p598 = pneg %p280
        $region94: #{tpu_custom_call.1} parent=67 // pred_check_branch
          %600 = sbr.rel (%p598) target = $region96
        $region95: #{tpu_custom_call.1} parent=67 // pred_region
          %602 = dma.done [#allocation16], 1024
        $region96: #{tpu_custom_call.1} parent=67 // pred_fallthru
          _
        %s603 = sand.u32 %s70, 1
        %s604 = scalar_lea.sflag [#allocation7], %s603
        %s605 = sand.u32 %s70, 1
        %s606 = smul.addr %s605, 32
        %s607 = scalar_lea.vmem [#allocation6], %s606
        %p608 = pneg %p83
        %p609 = pneg %p80
        %s610 = sand.u32 %s35, 1
        %s611 = scalar_lea.sflag [#allocation10], %s610
        %s612 = sand.u32 %s100, 1
        %s613 = smul.addr %s612, 8
        %s614 = scalar_lea.vmem [#allocation9], %s613
        %p615 = pneg %p113
        %p616 = pneg %p110
        %s617 = sand.u32 %s35, 1
        %s618 = scalar_lea.sflag [#allocation10], %s617
        %s619 = sand.u32 %s126, 1
        %s620 = smul.addr %s619, 64
        %s621 = scalar_lea.vmem [#allocation11], %s620
        %p622 = pneg %p139
        %p623 = pneg %p136
        %p624 = scmp.lt.s32.totalorder %s40, 2
        %s625 = scalar_select %p624, %s40, 2
        %s626 = scalar_lea.vmem %s4, %s625
        %p627 = pneg %p165
        %p628 = pneg %p162
        %s629 = sand.u32 %s35, 1
        %s630 = scalar_lea.sflag [#allocation13], %s629
        %s631 = sand.u32 %s178, 1
        %s632 = smul.addr %s631, 64
        %s633 = scalar_lea.vmem [#allocation12], %s632
        %p634 = pneg %p191
        %p635 = pneg %p188
        %s636 = sand.u32 %s35, 1
        %s637 = scalar_lea.sflag [#allocation13], %s636
        %s638 = sand.u32 %s204, 1
        %s639 = scalar_lea.vmem [#allocation14], %s638
        %p640 = pneg %p217
        %p641 = pneg %p214
        %p642 = pneg %p238
        %p643 = pneg %p235
        %p644 = pneg %p259
        %p645 = pneg %p256
        %p646 = pneg %p280
        %p647 = pneg %p277
        %p648 = pneg %p301
        %p649 = pneg %p298
        %p650 = pneg %p322
        %p651 = pneg %p319
        %p652 = pneg %p343
        %p653 = pneg %p340
        %p654 = pneg %p364
        %p655 = pneg %p361
        %p656 = scmp.eq.s32.totalorder %s40, 0
        %s657 = scalar_select %p656, %s41, 0
        %s658 = scalar_select %p656, %s42, 0
        %s659 = smul.u32 4, %s657
        %p660 = scmp.eq.s32.totalorder %s40, 2
        %s661 = scalar_select %p660, %s41, 0
        %p662 = scmp.lt.s32.totalorder %s40, 2
        %s663 = scalar_select %p662, %s40, 2
        %s664 = scalar_lea.vmem %s4, %s663
        %p665 = scmp.eq.s32.totalorder %s40, 0
        %p666 = scmp.eq.s32.totalorder %s41, 0
        %p667 = pnand %p665, %p666
        %p668 = pneg %p667
        %p669 = scmp.eq.s32.totalorder %s42, 0
        %p670 = pnand %p668, %p669
        %p671 = pneg %p670
        // Predicated region
        $region97: #{tpu_custom_call.1} parent=67 // pred_check
          _
        $region98: #{tpu_custom_call.1} parent=67 // pred_check_branch
          %673 = sbr.rel (%p670) target = $region100
        $region99: #{tpu_custom_call.1} parent=67 // pred_region
          $region101: #{tpu_custom_call.1} parent=99
            #allocation19 [shape = 's32[1]{0}', space=sflag, size = 0x4, scoped, tag = 'scoped memory for tpu_custom_call.1']
            %s674 = scalar_lea.vmem [#allocation3], 64
            // Predicated region
            $region102: #{tpu_custom_call.1} parent=101 // pred_check
              _
            $region103: #{tpu_custom_call.1} parent=101 // pred_check_branch
              %676 = sbr.rel target = $region105
            $region104: #{tpu_custom_call.1} parent=101 // pred_region
              %677 = sst [smem:[#allocation22]] [#allocation21]
              %678 = sst [smem:[#allocation23]] [#allocation20]
            $region105: #{tpu_custom_call.1} parent=101 // pred_fallthru
              _
            %680 = shalt.err (0)
            %s682 = sshll.u32 %s1, 4
            %s683 = int_to_ptr.hbm [resolvable:$true] %s682
            %s684 = sshll.u32 %s674, 4
            %s685 = int_to_ptr.vmem [resolvable:$true] %s684
            %687 = dma.hbm_to_vmem [thread:$0]  %s683, 1024, %s685, [#allocation19]
            %s688 = smul.u32 4, 16
            %s689 = smul.u32 %s688, 1
            %s690 = sshll.u32 %s689, 4
            %691 = dma.done [#allocation19], %s690
        $region100: #{tpu_custom_call.1} parent=67 // pred_fallthru
          _
        // Predicated region
        $region106: #{tpu_custom_call.1} parent=67 // pred_check
          %p692 = pneg %p669
        $region107: #{tpu_custom_call.1} parent=67 // pred_check_branch
          %694 = sbr.rel (%p692) target = $region109
        $region108: #{tpu_custom_call.1} parent=67 // pred_region
          %695 = vst [vmem:[#allocation2] sm:$0xff] 0.0
          %696 = vst [vmem:[#allocation2 + $0x8] sm:$0xff] 0.0
          %697 = vst [vmem:[#allocation2 + $0x10] sm:$0xff] 0.0
          %698 = vst [vmem:[#allocation2 + $0x18] sm:$0xff] 0.0
          %699 = vst [vmem:[#allocation2 + $0x20] sm:$0xff] 0.0
          %700 = vst [vmem:[#allocation2 + $0x28] sm:$0xff] 0.0
          %701 = vst [vmem:[#allocation2 + $0x30] sm:$0xff] 0.0
          %702 = vst [vmem:[#allocation2 + $0x38] sm:$0xff] 0.0
          %703 = vst [vmem:[#allocation2 + $0x40] sm:$0xff] 0.0
          %704 = vst [vmem:[#allocation2 + $0x48] sm:$0xff] 0.0
          %705 = vst [vmem:[#allocation2 + $0x50] sm:$0xff] 0.0
          %706 = vst [vmem:[#allocation2 + $0x58] sm:$0xff] 0.0
          %707 = vst [vmem:[#allocation2 + $0x60] sm:$0xff] 0.0
          %708 = vst [vmem:[#allocation2 + $0x68] sm:$0xff] 0.0
          %709 = vst [vmem:[#allocation2 + $0x70] sm:$0xff] 0.0
          %710 = vst [vmem:[#allocation2 + $0x78] sm:$0xff] 0.0
        $region109: #{tpu_custom_call.1} parent=67 // pred_fallthru
          _
        %s711 = smul.u32 %s41, 128
        %s712 = smul.u32 %s42, 128
        // Predicated region
        $region110: #{tpu_custom_call.1} parent=67 // pred_check
          %p713 = pneg %p665
        $region111: #{tpu_custom_call.1} parent=67 // pred_check_branch
          %715 = sbr.rel (%p713) target = $region113
        $region112: #{tpu_custom_call.1} parent=67 // pred_region
          %v716 = vld [vmem:[%s548] sm:$0xff]
          %v717 = vld [vmem:[%s548 + $0x8] sm:$0xff]
          %v718 = vld [vmem:[%s548 + $0x10] sm:$0xff]
          %v719 = vld [vmem:[%s548 + $0x18] sm:$0xff]
          %v720 = vunpack.c.0.s8 %v716
          %v721 = vunpack.c.1.s8 %v716
          %v722 = vunpack.c.2.s8 %v716
          %v723 = vunpack.c.3.s8 %v716
          %v724 = vunpack.c.0.s8 %v717
          %v725 = vunpack.c.1.s8 %v717
          %v726 = vunpack.c.2.s8 %v717
          %v727 = vunpack.c.3.s8 %v717
          %v728 = vunpack.c.0.s8 %v718
          %v729 = vunpack.c.1.s8 %v718
          %v730 = vunpack.c.2.s8 %v718
          %v731 = vunpack.c.3.s8 %v718
          %v732 = vunpack.c.0.s8 %v719
          %v733 = vunpack.c.1.s8 %v719
          %v734 = vunpack.c.2.s8 %v719
          %v735 = vunpack.c.3.s8 %v719
          %v736 = vcvt.s32.f32 %v720
          %v737 = vcvt.s32.f32 %v721
          %v738 = vcvt.s32.f32 %v722
          %v739 = vcvt.s32.f32 %v723
          %v740 = vcvt.s32.f32 %v724
          %v741 = vcvt.s32.f32 %v725
          %v742 = vcvt.s32.f32 %v726
          %v743 = vcvt.s32.f32 %v727
          %v744 = vcvt.s32.f32 %v728
          %v745 = vcvt.s32.f32 %v729
          %v746 = vcvt.s32.f32 %v730
          %v747 = vcvt.s32.f32 %v731
          %v748 = vcvt.s32.f32 %v732
          %v749 = vcvt.s32.f32 %v733
          %v750 = vcvt.s32.f32 %v734
          %v751 = vcvt.s32.f32 %v735
          %v752 = vpack.c.bf16 %v736, %v736
          %v753 = vpack.c.bf16 %v737, %v737
          %v754 = vpack.c.bf16 %v738, %v738
          %v755 = vpack.c.bf16 %v739, %v739
          %v756 = vpack.c.bf16 %v740, %v740
          %v757 = vpack.c.bf16 %v741, %v741
          %v758 = vpack.c.bf16 %v742, %v742
          %v759 = vpack.c.bf16 %v743, %v743
          %v760 = vpack.c.bf16 %v744, %v744
          %v761 = vpack.c.bf16 %v745, %v745
          %v762 = vpack.c.bf16 %v746, %v746
          %v763 = vpack.c.bf16 %v747, %v747
          %v764 = vpack.c.bf16 %v748, %v748
          %v765 = vpack.c.bf16 %v749, %v749
          %v766 = vpack.c.bf16 %v750, %v750
          %v767 = vpack.c.bf16 %v751, %v751
          %s768 = sshra.s32 %s712, 7
          %s769 = sand.u32 %s712, 127
          %s770 = sshra.s32 %s711, 3
          %s771 = sand.u32 %s711, 7
          %s772 = sadd.s32 %s768, %s770
          %s773 = smul.addr %s772, 4
          %s774 = scalar_lea.vmem [#allocation5], %s773
          %775 = vst [vmem:[%s774] sm:$0xf] %v752
          %776 = vst [vmem:[%s774 + $0x4] sm:$0xf] %v753
          %777 = vst [vmem:[%s774 + $0x8] sm:$0xf] %v754
          %778 = vst [vmem:[%s774 + $0xc] sm:$0xf] %v755
          %779 = vst [vmem:[%s774 + $0x10] sm:$0xf] %v756
          %780 = vst [vmem:[%s774 + $0x14] sm:$0xf] %v757
          %781 = vst [vmem:[%s774 + $0x18] sm:$0xf] %v758
          %782 = vst [vmem:[%s774 + $0x1c] sm:$0xf] %v759
          %783 = vst [vmem:[%s774 + $0x20] sm:$0xf] %v760
          %784 = vst [vmem:[%s774 + $0x24] sm:$0xf] %v761
          %785 = vst [vmem:[%s774 + $0x28] sm:$0xf] %v762
          %786 = vst [vmem:[%s774 + $0x2c] sm:$0xf] %v763
          %787 = vst [vmem:[%s774 + $0x30] sm:$0xf] %v764
          %788 = vst [vmem:[%s774 + $0x34] sm:$0xf] %v765
          %789 = vst [vmem:[%s774 + $0x38] sm:$0xf] %v766
          %790 = vst [vmem:[%s774 + $0x3c] sm:$0xf] %v767
        $region113: #{tpu_custom_call.1} parent=67 // pred_fallthru
          _
        %s791 = sshra.s32 %s712, 7
        %s792 = sand.u32 %s712, 127
        %s793 = sshra.s32 %s711, 3
        %s794 = sand.u32 %s711, 7
        %s795 = sadd.s32 %s791, %s793
        %s796 = smul.addr %s795, 4
        %s797 = scalar_lea.vmem [#allocation5], %s796
        %v798 = vld [vmem:[%s797] sm:$0xf]
        %v799 = vld [vmem:[%s797 + $0x4] sm:$0xf]
        %v800 = vld [vmem:[%s797 + $0x8] sm:$0xf]
        %v801 = vld [vmem:[%s797 + $0xc] sm:$0xf]
        %v802 = vld [vmem:[%s797 + $0x10] sm:$0xf]
        %v803 = vld [vmem:[%s797 + $0x14] sm:$0xf]
        %v804 = vld [vmem:[%s797 + $0x18] sm:$0xf]
        %v805 = vld [vmem:[%s797 + $0x1c] sm:$0xf]
        %v806 = vld [vmem:[%s797 + $0x20] sm:$0xf]
        %v807 = vld [vmem:[%s797 + $0x24] sm:$0xf]
        %v808 = vld [vmem:[%s797 + $0x28] sm:$0xf]
        %v809 = vld [vmem:[%s797 + $0x2c] sm:$0xf]
        %v810 = vld [vmem:[%s797 + $0x30] sm:$0xf]
        %v811 = vld [vmem:[%s797 + $0x34] sm:$0xf]
        %v812 = vld [vmem:[%s797 + $0x38] sm:$0xf]
        %v813 = vld [vmem:[%s797 + $0x3c] sm:$0xf]
        %s814 = sadd.s32 %s40, 1
        %s815 = sand.u32 %s814, 1
        %s816 = smul.u32 %s815, 128
        %s817 = sadd.s32 %s816, %s712
        %s818 = sshra.s32 %s817, 3
        %s819 = sand.u32 %s817, 7
        %s820 = smul.addr %s818, 4
        %s821 = scalar_lea.vmem [#allocation3], %s820
        %v822 = vld [vmem:[%s821] sm:$0xf]
        %v823 = vld [vmem:[%s821 + $0x4] sm:$0xf]
        %v824 = vld [vmem:[%s821 + $0x8] sm:$0xf]
        %v825 = vld [vmem:[%s821 + $0xc] sm:$0xf]
        %v826 = vld [vmem:[%s821 + $0x10] sm:$0xf]
        %v827 = vld [vmem:[%s821 + $0x14] sm:$0xf]
        %v828 = vld [vmem:[%s821 + $0x18] sm:$0xf]
        %v829 = vld [vmem:[%s821 + $0x1c] sm:$0xf]
        %v830 = vld [vmem:[%s821 + $0x20] sm:$0xf]
        %v831 = vld [vmem:[%s821 + $0x24] sm:$0xf]
        %v832 = vld [vmem:[%s821 + $0x28] sm:$0xf]
        %v833 = vld [vmem:[%s821 + $0x2c] sm:$0xf]
        %v834 = vld [vmem:[%s821 + $0x30] sm:$0xf]
        %v835 = vld [vmem:[%s821 + $0x34] sm:$0xf]
        %v836 = vld [vmem:[%s821 + $0x38] sm:$0xf]
        %v837 = vld [vmem:[%s821 + $0x3c] sm:$0xf]
        %v838 = vld [vmem:[#allocation2] sm:$0xff]
        %v839 = vld [vmem:[#allocation2 + $0x8] sm:$0xff]
        %v840 = vld [vmem:[#allocation2 + $0x10] sm:$0xff]
        %v841 = vld [vmem:[#allocation2 + $0x18] sm:$0xff]
        %v842 = vld [vmem:[#allocation2 + $0x20] sm:$0xff]
        %v843 = vld [vmem:[#allocation2 + $0x28] sm:$0xff]
        %v844 = vld [vmem:[#allocation2 + $0x30] sm:$0xff]
        %v845 = vld [vmem:[#allocation2 + $0x38] sm:$0xff]
        %v846 = vld [vmem:[#allocation2 + $0x40] sm:$0xff]
        %v847 = vld [vmem:[#allocation2 + $0x48] sm:$0xff]
        %v848 = vld [vmem:[#allocation2 + $0x50] sm:$0xff]
        %v849 = vld [vmem:[#allocation2 + $0x58] sm:$0xff]
        %v850 = vld [vmem:[#allocation2 + $0x60] sm:$0xff]
        %v851 = vld [vmem:[#allocation2 + $0x68] sm:$0xff]
        %v852 = vld [vmem:[#allocation2 + $0x70] sm:$0xff]
        %v853 = vld [vmem:[#allocation2 + $0x78] sm:$0xff]
        %v870 = vunpack.c.l.b16 %v798
        %v871 = vunpack.c.l.b16 %v799
        %v872 = vunpack.c.l.b16 %v800
        %v873 = vunpack.c.l.b16 %v801
        %v874 = vunpack.c.l.b16 %v802
        %v875 = vunpack.c.l.b16 %v803
        %v876 = vunpack.c.l.b16 %v804
        %v877 = vunpack.c.l.b16 %v805
        %v878 = vunpack.c.l.b16 %v806
        %v879 = vunpack.c.l.b16 %v807
        %v880 = vunpack.c.l.b16 %v808
        %v881 = vunpack.c.l.b16 %v809
        %v882 = vunpack.c.l.b16 %v810
        %v883 = vunpack.c.l.b16 %v811
        %v884 = vunpack.c.l.b16 %v812
        %v885 = vunpack.c.l.b16 %v813
        %v886 = vpack.c.b16 %v871, %v870
        %v887 = vpack.c.b16 %v873, %v872
        %v888 = vpack.c.b16 %v875, %v874
        %v889 = vpack.c.b16 %v877, %v876
        %v890 = vpack.c.b16 %v879, %v878
        %v891 = vpack.c.b16 %v881, %v880
        %v892 = vpack.c.b16 %v883, %v882
        %v893 = vpack.c.b16 %v885, %v884
        %v918 = vunpack.c.l.b16 %v822
        %v919 = vunpack.c.l.b16 %v823
        %v920 = vunpack.c.l.b16 %v824
        %v921 = vunpack.c.l.b16 %v825
        %v922 = vunpack.c.l.b16 %v826
        %v923 = vunpack.c.l.b16 %v827
        %v924 = vunpack.c.l.b16 %v828
        %v925 = vunpack.c.l.b16 %v829
        %v926 = vunpack.c.l.b16 %v830
        %v927 = vunpack.c.l.b16 %v831
        %v928 = vunpack.c.l.b16 %v832
        %v929 = vunpack.c.l.b16 %v833
        %v930 = vunpack.c.l.b16 %v834
        %v931 = vunpack.c.l.b16 %v835
        %v932 = vunpack.c.l.b16 %v836
        %v933 = vunpack.c.l.b16 %v837
        %v934 = vpack.c.b16 %v919, %v918
        %v935 = vpack.c.b16 %v921, %v920
        %v936 = vpack.c.b16 %v923, %v922
        %v937 = vpack.c.b16 %v925, %v924
        %v938 = vpack.c.b16 %v927, %v926
        %v939 = vpack.c.b16 %v929, %v928
        %v940 = vpack.c.b16 %v931, %v930
        %v941 = vpack.c.b16 %v933, %v932
        %950 = vmatpush.bf16.msra.mxu0 %v941
        %951 = vmatpush.bf16.msra.mxu0 %v940
        %952 = vmatpush.bf16.msra.mxu0 %v939
        %953 = vmatpush.bf16.msra.mxu0 %v938
        %954 = vmatpush.bf16.msra.mxu0 %v937
        %955 = vmatpush.bf16.msra.mxu0 %v936
        %956 = vmatpush.bf16.msra.mxu0 %v935
        %957 = vmatpush.bf16.msra.mxu0 %v934
        %958 = vmatmul.bf16.gmra.mxu0 %v886
        %v959 = vpop.f32.mrf.mxu0
        %v960 = vadd.f32 0.0, %v959
        %v961 = vpop.f32.mrf.mxu0
        %v962 = vadd.f32 0.0, %v961
        %963 = vmatmul.bf16.gmra.mxu0 %v887
        %v964 = vpop.f32.mrf.mxu0
        %v965 = vadd.f32 0.0, %v964
        %v966 = vpop.f32.mrf.mxu0
        %v967 = vadd.f32 0.0, %v966
        %968 = vmatmul.bf16.gmra.mxu0 %v888
        %v969 = vpop.f32.mrf.mxu0
        %v970 = vadd.f32 0.0, %v969
        %v971 = vpop.f32.mrf.mxu0
        %v972 = vadd.f32 0.0, %v971
        %973 = vmatmul.bf16.gmra.mxu0 %v889
        %v974 = vpop.f32.mrf.mxu0
        %v975 = vadd.f32 0.0, %v974
        %v976 = vpop.f32.mrf.mxu0
        %v977 = vadd.f32 0.0, %v976
        %978 = vmatmul.bf16.gmra.mxu0 %v890
        %v979 = vpop.f32.mrf.mxu0
        %v980 = vadd.f32 0.0, %v979
        %v981 = vpop.f32.mrf.mxu0
        %v982 = vadd.f32 0.0, %v981
        %983 = vmatmul.bf16.gmra.mxu0 %v891
        %v984 = vpop.f32.mrf.mxu0
        %v985 = vadd.f32 0.0, %v984
        %v986 = vpop.f32.mrf.mxu0
        %v987 = vadd.f32 0.0, %v986
        %988 = vmatmul.bf16.gmra.mxu0 %v892
        %v989 = vpop.f32.mrf.mxu0
        %v990 = vadd.f32 0.0, %v989
        %v991 = vpop.f32.mrf.mxu0
        %v992 = vadd.f32 0.0, %v991
        %993 = vmatmul.bf16.gmra.mxu0 %v893
        %v994 = vpop.f32.mrf.mxu0
        %v995 = vadd.f32 0.0, %v994
        %v996 = vpop.f32.mrf.mxu0
        %v997 = vadd.f32 0.0, %v996
        %998 = vdwg.mxu0
        %v999 = vadd.f32 %v838, %v960
        %v1000 = vadd.f32 %v839, %v962
        %v1001 = vadd.f32 %v840, %v965
        %v1002 = vadd.f32 %v841, %v967
        %v1003 = vadd.f32 %v842, %v970
        %v1004 = vadd.f32 %v843, %v972
        %v1005 = vadd.f32 %v844, %v975
        %v1006 = vadd.f32 %v845, %v977
        %v1007 = vadd.f32 %v846, %v980
        %v1008 = vadd.f32 %v847, %v982
        %v1009 = vadd.f32 %v848, %v985
        %v1010 = vadd.f32 %v849, %v987
        %v1011 = vadd.f32 %v850, %v990
        %v1012 = vadd.f32 %v851, %v992
        %v1013 = vadd.f32 %v852, %v995
        %v1014 = vadd.f32 %v853, %v997
        %1015 = vst [vmem:[#allocation2] sm:$0xff] %v999
        %1016 = vst [vmem:[#allocation2 + $0x8] sm:$0xff] %v1000
        %1017 = vst [vmem:[#allocation2 + $0x10] sm:$0xff] %v1001
        %1018 = vst [vmem:[#allocation2 + $0x18] sm:$0xff] %v1002
        %1019 = vst [vmem:[#allocation2 + $0x20] sm:$0xff] %v1003
        %1020 = vst [vmem:[#allocation2 + $0x28] sm:$0xff] %v1004
        %1021 = vst [vmem:[#allocation2 + $0x30] sm:$0xff] %v1005
        %1022 = vst [vmem:[#allocation2 + $0x38] sm:$0xff] %v1006
        %1023 = vst [vmem:[#allocation2 + $0x40] sm:$0xff] %v1007
        %1024 = vst [vmem:[#allocation2 + $0x48] sm:$0xff] %v1008
        %1025 = vst [vmem:[#allocation2 + $0x50] sm:$0xff] %v1009
        %1026 = vst [vmem:[#allocation2 + $0x58] sm:$0xff] %v1010
        %1027 = vst [vmem:[#allocation2 + $0x60] sm:$0xff] %v1011
        %1028 = vst [vmem:[#allocation2 + $0x68] sm:$0xff] %v1012
        %1029 = vst [vmem:[#allocation2 + $0x70] sm:$0xff] %v1013
        %1030 = vst [vmem:[#allocation2 + $0x78] sm:$0xff] %v1014
        // Predicated region
        $region114: #{tpu_custom_call.1} parent=67 // pred_check
          %p1031 = pneg %p669
        $region115: #{tpu_custom_call.1} parent=67 // pred_check_branch
          %1033 = sbr.rel (%p1031) target = $region117
        $region116: #{tpu_custom_call.1} parent=67 // pred_region
          %v1034 = vld [vmem:[#allocation2] sm:$0xff]
          %v1035 = vld [vmem:[#allocation2 + $0x8] sm:$0xff]
          %v1036 = vld [vmem:[#allocation2 + $0x10] sm:$0xff]
          %v1037 = vld [vmem:[#allocation2 + $0x18] sm:$0xff]
          %v1038 = vld [vmem:[#allocation2 + $0x20] sm:$0xff]
          %v1039 = vld [vmem:[#allocation2 + $0x28] sm:$0xff]
          %v1040 = vld [vmem:[#allocation2 + $0x30] sm:$0xff]
          %v1041 = vld [vmem:[#allocation2 + $0x38] sm:$0xff]
          %v1042 = vld [vmem:[#allocation2 + $0x40] sm:$0xff]
          %v1043 = vld [vmem:[#allocation2 + $0x48] sm:$0xff]
          %v1044 = vld [vmem:[#allocation2 + $0x50] sm:$0xff]
          %v1045 = vld [vmem:[#allocation2 + $0x58] sm:$0xff]
          %v1046 = vld [vmem:[#allocation2 + $0x60] sm:$0xff]
          %v1047 = vld [vmem:[#allocation2 + $0x68] sm:$0xff]
          %v1048 = vld [vmem:[#allocation2 + $0x70] sm:$0xff]
          %v1049 = vld [vmem:[#allocation2 + $0x78] sm:$0xff]
          %v1050 = vpack.c.bf16 %v1035, %v1034
          %v1051 = vpack.c.bf16 %v1037, %v1036
          %v1052 = vpack.c.bf16 %v1039, %v1038
          %v1053 = vpack.c.bf16 %v1041, %v1040
          %v1054 = vpack.c.bf16 %v1043, %v1042
          %v1055 = vpack.c.bf16 %v1045, %v1044
          %v1056 = vpack.c.bf16 %v1047, %v1046
          %v1057 = vpack.c.bf16 %v1049, %v1048
          %v1058 = vld [vmem:[%s568] sm:$0xf]
          %v1059 = vld [vmem:[%s568 + $0x4] sm:$0xf]
          %v1060 = vld [vmem:[%s568 + $0x8] sm:$0xf]
          %v1061 = vld [vmem:[%s568 + $0xc] sm:$0xf]
          %v1062 = vld [vmem:[%s568 + $0x10] sm:$0xf]
          %v1063 = vld [vmem:[%s568 + $0x14] sm:$0xf]
          %v1064 = vld [vmem:[%s568 + $0x18] sm:$0xf]
          %v1065 = vld [vmem:[%s568 + $0x1c] sm:$0xf]
          %v1066 = vld [vmem:[%s568 + $0x20] sm:$0xf]
          %v1067 = vld [vmem:[%s568 + $0x24] sm:$0xf]
          %v1068 = vld [vmem:[%s568 + $0x28] sm:$0xf]
          %v1069 = vld [vmem:[%s568 + $0x2c] sm:$0xf]
          %v1070 = vld [vmem:[%s568 + $0x30] sm:$0xf]
          %v1071 = vld [vmem:[%s568 + $0x34] sm:$0xf]
          %v1072 = vld [vmem:[%s568 + $0x38] sm:$0xf]
          %v1073 = vld [vmem:[%s568 + $0x3c] sm:$0xf]
          %v1074 = vld [vmem:[%s664] sm:$0x1]
          %v1076 = vperm.slane %v1074, 0
          %v1094 = vunpack.c.l.b16 %v1058
          %v1095 = vunpack.c.l.b16 %v1059
          %v1096 = vunpack.c.l.b16 %v1060
          %v1097 = vunpack.c.l.b16 %v1061
          %v1098 = vunpack.c.l.b16 %v1062
          %v1099 = vunpack.c.l.b16 %v1063
          %v1100 = vunpack.c.l.b16 %v1064
          %v1101 = vunpack.c.l.b16 %v1065
          %v1102 = vunpack.c.l.b16 %v1066
          %v1103 = vunpack.c.l.b16 %v1067
          %v1104 = vunpack.c.l.b16 %v1068
          %v1105 = vunpack.c.l.b16 %v1069
          %v1106 = vunpack.c.l.b16 %v1070
          %v1107 = vunpack.c.l.b16 %v1071
          %v1108 = vunpack.c.l.b16 %v1072
          %v1109 = vunpack.c.l.b16 %v1073
          %v1110 = vpack.c.b16 %v1095, %v1094
          %v1111 = vpack.c.b16 %v1097, %v1096
          %v1112 = vpack.c.b16 %v1099, %v1098
          %v1113 = vpack.c.b16 %v1101, %v1100
          %v1114 = vpack.c.b16 %v1103, %v1102
          %v1115 = vpack.c.b16 %v1105, %v1104
          %v1116 = vpack.c.b16 %v1107, %v1106
          %v1117 = vpack.c.b16 %v1109, %v1108
          %1126 = vmatpush.bf16.msra.mxu0 %v1117
          %1127 = vmatpush.bf16.msra.mxu0 %v1116
          %1128 = vmatpush.bf16.msra.mxu0 %v1115
          %1129 = vmatpush.bf16.msra.mxu0 %v1114
          %1130 = vmatpush.bf16.msra.mxu0 %v1113
          %1131 = vmatpush.bf16.msra.mxu0 %v1112
          %1132 = vmatpush.bf16.msra.mxu0 %v1111
          %1133 = vmatpush.bf16.msra.mxu0 %v1110
          %1134 = vmatmul.bf16.gmra.mxu0 %v1050
          %v1135 = vpop.f32.mrf.mxu0
          %v1136 = vadd.f32 %v1076, %v1135
          %v1137 = vpop.f32.mrf.mxu0
          %v1138 = vadd.f32 %v1076, %v1137
          %1139 = vmatmul.bf16.gmra.mxu0 %v1051
          %v1140 = vpop.f32.mrf.mxu0
          %v1141 = vadd.f32 %v1076, %v1140
          %v1142 = vpop.f32.mrf.mxu0
          %v1143 = vadd.f32 %v1076, %v1142
          %1144 = vmatmul.bf16.gmra.mxu0 %v1052
          %v1145 = vpop.f32.mrf.mxu0
          %v1146 = vadd.f32 %v1076, %v1145
          %v1147 = vpop.f32.mrf.mxu0
          %v1148 = vadd.f32 %v1076, %v1147
          %1149 = vmatmul.bf16.gmra.mxu0 %v1053
          %v1150 = vpop.f32.mrf.mxu0
          %v1151 = vadd.f32 %v1076, %v1150
          %v1152 = vpop.f32.mrf.mxu0
          %v1153 = vadd.f32 %v1076, %v1152
          %1154 = vmatmul.bf16.gmra.mxu0 %v1054
          %v1155 = vpop.f32.mrf.mxu0
          %v1156 = vadd.f32 %v1076, %v1155
          %v1157 = vpop.f32.mrf.mxu0
          %v1158 = vadd.f32 %v1076, %v1157
          %1159 = vmatmul.bf16.gmra.mxu0 %v1055
          %v1160 = vpop.f32.mrf.mxu0
          %v1161 = vadd.f32 %v1076, %v1160
          %v1162 = vpop.f32.mrf.mxu0
          %v1163 = vadd.f32 %v1076, %v1162
          %1164 = vmatmul.bf16.gmra.mxu0 %v1056
          %v1165 = vpop.f32.mrf.mxu0
          %v1166 = vadd.f32 %v1076, %v1165
          %v1167 = vpop.f32.mrf.mxu0
          %v1168 = vadd.f32 %v1076, %v1167
          %1169 = vmatmul.bf16.gmra.mxu0 %v1057
          %v1170 = vpop.f32.mrf.mxu0
          %v1171 = vadd.f32 %v1076, %v1170
          %v1172 = vpop.f32.mrf.mxu0
          %v1173 = vadd.f32 %v1076, %v1172
          %1174 = vdwg.mxu0
          %v1175 = vmax.f32 %v1136, 0.0
          %v1176 = vmax.f32 %v1138, 0.0
          %v1177 = vmax.f32 %v1141, 0.0
          %v1178 = vmax.f32 %v1143, 0.0
          %v1179 = vmax.f32 %v1146, 0.0
          %v1180 = vmax.f32 %v1148, 0.0
          %v1181 = vmax.f32 %v1151, 0.0
          %v1182 = vmax.f32 %v1153, 0.0
          %v1183 = vmax.f32 %v1156, 0.0
          %v1184 = vmax.f32 %v1158, 0.0
          %v1185 = vmax.f32 %v1161, 0.0
          %v1186 = vmax.f32 %v1163, 0.0
          %v1187 = vmax.f32 %v1166, 0.0
          %v1188 = vmax.f32 %v1168, 0.0
          %v1189 = vmax.f32 %v1171, 0.0
          %v1190 = vmax.f32 %v1173, 0.0
          %v1191 = vpack.c.bf16 %v1176, %v1175
          %v1192 = vpack.c.bf16 %v1178, %v1177
          %v1193 = vpack.c.bf16 %v1180, %v1179
          %v1194 = vpack.c.bf16 %v1182, %v1181
          %v1195 = vpack.c.bf16 %v1184, %v1183
          %v1196 = vpack.c.bf16 %v1186, %v1185
          %v1197 = vpack.c.bf16 %v1188, %v1187
          %v1198 = vpack.c.bf16 %v1190, %v1189
          %v1199 = vld [vmem:[%s578] sm:$0xf]
          %v1200 = vld [vmem:[%s578 + $0x4] sm:$0xf]
          %v1201 = vld [vmem:[%s578 + $0x8] sm:$0xf]
          %v1202 = vld [vmem:[%s578 + $0xc] sm:$0xf]
          %v1203 = vld [vmem:[%s578 + $0x10] sm:$0xf]
          %v1204 = vld [vmem:[%s578 + $0x14] sm:$0xf]
          %v1205 = vld [vmem:[%s578 + $0x18] sm:$0xf]
          %v1206 = vld [vmem:[%s578 + $0x1c] sm:$0xf]
          %v1207 = vld [vmem:[%s578 + $0x20] sm:$0xf]
          %v1208 = vld [vmem:[%s578 + $0x24] sm:$0xf]
          %v1209 = vld [vmem:[%s578 + $0x28] sm:$0xf]
          %v1210 = vld [vmem:[%s578 + $0x2c] sm:$0xf]
          %v1211 = vld [vmem:[%s578 + $0x30] sm:$0xf]
          %v1212 = vld [vmem:[%s578 + $0x34] sm:$0xf]
          %v1213 = vld [vmem:[%s578 + $0x38] sm:$0xf]
          %v1214 = vld [vmem:[%s578 + $0x3c] sm:$0xf]
          %v1215 = vld [vmem:[%s587] sm:$0x1]
          %v1217 = vperm.slane %v1215, 0
          %v1235 = vunpack.c.l.b16 %v1199
          %v1236 = vunpack.c.l.b16 %v1200
          %v1237 = vunpack.c.l.b16 %v1201
          %v1238 = vunpack.c.l.b16 %v1202
          %v1239 = vunpack.c.l.b16 %v1203
          %v1240 = vunpack.c.l.b16 %v1204
          %v1241 = vunpack.c.l.b16 %v1205
          %v1242 = vunpack.c.l.b16 %v1206
          %v1243 = vunpack.c.l.b16 %v1207
          %v1244 = vunpack.c.l.b16 %v1208
          %v1245 = vunpack.c.l.b16 %v1209
          %v1246 = vunpack.c.l.b16 %v1210
          %v1247 = vunpack.c.l.b16 %v1211
          %v1248 = vunpack.c.l.b16 %v1212
          %v1249 = vunpack.c.l.b16 %v1213
          %v1250 = vunpack.c.l.b16 %v1214
          %v1251 = vpack.c.b16 %v1236, %v1235
          %v1252 = vpack.c.b16 %v1238, %v1237
          %v1253 = vpack.c.b16 %v1240, %v1239
          %v1254 = vpack.c.b16 %v1242, %v1241
          %v1255 = vpack.c.b16 %v1244, %v1243
          %v1256 = vpack.c.b16 %v1246, %v1245
          %v1257 = vpack.c.b16 %v1248, %v1247
          %v1258 = vpack.c.b16 %v1250, %v1249
          %1267 = vmatpush.bf16.msra.mxu0 %v1258
          %1268 = vmatpush.bf16.msra.mxu0 %v1257
          %1269 = vmatpush.bf16.msra.mxu0 %v1256
          %1270 = vmatpush.bf16.msra.mxu0 %v1255
          %1271 = vmatpush.bf16.msra.mxu0 %v1254
          %1272 = vmatpush.bf16.msra.mxu0 %v1253
          %1273 = vmatpush.bf16.msra.mxu0 %v1252
          %1274 = vmatpush.bf16.msra.mxu0 %v1251
          %1275 = vmatmul.bf16.gmra.mxu0 %v1191
          %v1276 = vpop.f32.mrf.mxu0
          %v1277 = vadd.f32 %v1217, %v1276
          %v1278 = vpop.f32.mrf.mxu0
          %v1279 = vadd.f32 %v1217, %v1278
          %1280 = vmatmul.bf16.gmra.mxu0 %v1192
          %v1281 = vpop.f32.mrf.mxu0
          %v1282 = vadd.f32 %v1217, %v1281
          %v1283 = vpop.f32.mrf.mxu0
          %v1284 = vadd.f32 %v1217, %v1283
          %1285 = vmatmul.bf16.gmra.mxu0 %v1193
          %v1286 = vpop.f32.mrf.mxu0
          %v1287 = vadd.f32 %v1217, %v1286
          %v1288 = vpop.f32.mrf.mxu0
          %v1289 = vadd.f32 %v1217, %v1288
          %1290 = vmatmul.bf16.gmra.mxu0 %v1194
          %v1291 = vpop.f32.mrf.mxu0
          %v1292 = vadd.f32 %v1217, %v1291
          %v1293 = vpop.f32.mrf.mxu0
          %v1294 = vadd.f32 %v1217, %v1293
          %1295 = vmatmul.bf16.gmra.mxu0 %v1195
          %v1296 = vpop.f32.mrf.mxu0
          %v1297 = vadd.f32 %v1217, %v1296
          %v1298 = vpop.f32.mrf.mxu0
          %v1299 = vadd.f32 %v1217, %v1298
          %1300 = vmatmul.bf16.gmra.mxu0 %v1196
          %v1301 = vpop.f32.mrf.mxu0
          %v1302 = vadd.f32 %v1217, %v1301
          %v1303 = vpop.f32.mrf.mxu0
          %v1304 = vadd.f32 %v1217, %v1303
          %1305 = vmatmul.bf16.gmra.mxu0 %v1197
          %v1306 = vpop.f32.mrf.mxu0
          %v1307 = vadd.f32 %v1217, %v1306
          %v1308 = vpop.f32.mrf.mxu0
          %v1309 = vadd.f32 %v1217, %v1308
          %1310 = vmatmul.bf16.gmra.mxu0 %v1198
          %v1311 = vpop.f32.mrf.mxu0
          %v1312 = vadd.f32 %v1217, %v1311
          %v1313 = vpop.f32.mrf.mxu0
          %v1314 = vadd.f32 %v1217, %v1313
          %1315 = vdwg.mxu0
          %p1316 = scmp.lt.s32.totalorder %s40, 2
          // Predicated region
          $region118: #{tpu_custom_call.1} parent=116 // pred_check
            %p1317 = pneg %p1316
          $region119: #{tpu_custom_call.1} parent=116 // pred_check_branch
            %1319 = sbr.rel (%p1317) target = $region121
          $region120: #{tpu_custom_call.1} parent=116 // pred_region
            %s1320 = sand.u32 %s40, 1
            %s1321 = smul.u32 %s1320, 128
            %s1322 = sadd.s32 %s1321, %s711
            %v1323 = vmax.f32 %v1277, 0.0
            %v1324 = vmax.f32 %v1279, 0.0
            %v1325 = vmax.f32 %v1282, 0.0
            %v1326 = vmax.f32 %v1284, 0.0
            %v1327 = vmax.f32 %v1287, 0.0
            %v1328 = vmax.f32 %v1289, 0.0
            %v1329 = vmax.f32 %v1292, 0.0
            %v1330 = vmax.f32 %v1294, 0.0
            %v1331 = vmax.f32 %v1297, 0.0
            %v1332 = vmax.f32 %v1299, 0.0
            %v1333 = vmax.f32 %v1302, 0.0
            %v1334 = vmax.f32 %v1304, 0.0
            %v1335 = vmax.f32 %v1307, 0.0
            %v1336 = vmax.f32 %v1309, 0.0
            %v1337 = vmax.f32 %v1312, 0.0
            %v1338 = vmax.f32 %v1314, 0.0
            %v1339 = vpack.c.bf16 %v1323, %v1323
            %v1340 = vpack.c.bf16 %v1324, %v1324
            %v1341 = vpack.c.bf16 %v1325, %v1325
            %v1342 = vpack.c.bf16 %v1326, %v1326
            %v1343 = vpack.c.bf16 %v1327, %v1327
            %v1344 = vpack.c.bf16 %v1328, %v1328
            %v1345 = vpack.c.bf16 %v1329, %v1329
            %v1346 = vpack.c.bf16 %v1330, %v1330
            %v1347 = vpack.c.bf16 %v1331, %v1331
            %v1348 = vpack.c.bf16 %v1332, %v1332
            %v1349 = vpack.c.bf16 %v1333, %v1333
            %v1350 = vpack.c.bf16 %v1334, %v1334
            %v1351 = vpack.c.bf16 %v1335, %v1335
            %v1352 = vpack.c.bf16 %v1336, %v1336
            %v1353 = vpack.c.bf16 %v1337, %v1337
            %v1354 = vpack.c.bf16 %v1338, %v1338
            %s1355 = sshra.s32 %s1322, 3
            %s1356 = sand.u32 %s1322, 7
            %s1357 = smul.addr %s1355, 4
            %s1358 = scalar_lea.vmem [#allocation3], %s1357
            %1359 = vst [vmem:[%s1358] sm:$0xf] %v1339
            %1360 = vst [vmem:[%s1358 + $0x4] sm:$0xf] %v1340
            %1361 = vst [vmem:[%s1358 + $0x8] sm:$0xf] %v1341
            %1362 = vst [vmem:[%s1358 + $0xc] sm:$0xf] %v1342
            %1363 = vst [vmem:[%s1358 + $0x10] sm:$0xf] %v1343
            %1364 = vst [vmem:[%s1358 + $0x14] sm:$0xf] %v1344
            %1365 = vst [vmem:[%s1358 + $0x18] sm:$0xf] %v1345
            %1366 = vst [vmem:[%s1358 + $0x1c] sm:$0xf] %v1346
            %1367 = vst [vmem:[%s1358 + $0x20] sm:$0xf] %v1347
            %1368 = vst [vmem:[%s1358 + $0x24] sm:$0xf] %v1348
            %1369 = vst [vmem:[%s1358 + $0x28] sm:$0xf] %v1349
            %1370 = vst [vmem:[%s1358 + $0x2c] sm:$0xf] %v1350
            %1371 = vst [vmem:[%s1358 + $0x30] sm:$0xf] %v1351
            %1372 = vst [vmem:[%s1358 + $0x34] sm:$0xf] %v1352
            %1373 = vst [vmem:[%s1358 + $0x38] sm:$0xf] %v1353
            %1374 = vst [vmem:[%s1358 + $0x3c] sm:$0xf] %v1354
          $region121: #{tpu_custom_call.1} parent=116 // pred_fallthru
            _
          %p1375 = scmp.eq.s32.totalorder %s40, 2
          // Predicated region
          $region122: #{tpu_custom_call.1} parent=116 // pred_check
            %p1376 = pneg %p1375
          $region123: #{tpu_custom_call.1} parent=116 // pred_check_branch
            %1378 = sbr.rel (%p1376) target = $region125
          $region124: #{tpu_custom_call.1} parent=116 // pred_region
            // Predicated region
            $region126: #{tpu_custom_call.1} parent=124 // pred_check
              %p1379 = pneg %p666
            $region127: #{tpu_custom_call.1} parent=124 // pred_check_branch
              %1381 = sbr.rel (%p1379) target = $region129
            $region128: #{tpu_custom_call.1} parent=124 // pred_region
              %1382 = vst [vmem:[#allocation4] sm:$0xff] 0.0
            $region129: #{tpu_custom_call.1} parent=124 // pred_fallthru
              _
            %v1383 = vld [vmem:[#allocation4] sm:$0xff]
            %v1384 = vld [vmem:[%s558] sm:$0xff]
            %1385 = vmatpush.msra.mxu0 %v1314
            %1386 = vmatpush.msra.mxu0 %v1312
            %1387 = vmatpush.msra.mxu0 %v1309
            %1388 = vmatpush.msra.mxu0 %v1307
            %1389 = vmatpush.msra.mxu0 %v1304
            %1390 = vmatpush.msra.mxu0 %v1302
            %1391 = vmatpush.msra.mxu0 %v1299
            %1392 = vmatpush.msra.mxu0 %v1297
            %1393 = vmatpush.msra.mxu0 %v1294
            %1394 = vmatpush.msra.mxu0 %v1292
            %1395 = vmatpush.msra.mxu0 %v1289
            %1396 = vmatpush.msra.mxu0 %v1287
            %1397 = vmatpush.msra.mxu0 %v1284
            %1398 = vmatpush.msra.mxu0 %v1282
            %1399 = vmatpush.msra.mxu0 %v1279
            %1400 = vmatpush.msra.mxu0 %v1277
            %1401 = vmatmul.f32.gmra.mxu0 %v1384
            %v1402 = vpop.f32.mrf.mxu0
            %v1403 = vadd.f32 0.0, %v1402
            %1404 = vdwg.mxu0
            %v1405 = vadd.f32 %v1383, %v1403
            %1406 = vst [vmem:[#allocation4] sm:$0xff] %v1405
            // Predicated region
            $region130: #{tpu_custom_call.1} parent=124 // pred_check
              %p1407 = pneg %p666
            $region131: #{tpu_custom_call.1} parent=124 // pred_check_branch
              %1409 = sbr.rel (%p1407) target = $region133
            $region132: #{tpu_custom_call.1} parent=124 // pred_region
              %v1410 = vld [vmem:[#allocation4] sm:$0xff]
              %v1411 = vpack.c.bf16 %v1410, %v1410
              %v1412 = vld [vmem:[#allocation15] sm:$0xf]
              %v1413 = vld [vmem:[#allocation15 + $0x4] sm:$0xf]
              %v1414 = vld [vmem:[#allocation15 + $0x8] sm:$0xf]
              %v1415 = vld [vmem:[#allocation15 + $0xc] sm:$0xf]
              %v1416 = vld [vmem:[#allocation15 + $0x10] sm:$0xf]
              %v1417 = vld [vmem:[#allocation15 + $0x14] sm:$0xf]
              %v1418 = vld [vmem:[#allocation15 + $0x18] sm:$0xf]
              %v1419 = vld [vmem:[#allocation15 + $0x1c] sm:$0xf]
              %v1420 = vld [vmem:[#allocation15 + $0x20] sm:$0xf]
              %v1421 = vld [vmem:[#allocation15 + $0x24] sm:$0xf]
              %v1422 = vld [vmem:[#allocation15 + $0x28] sm:$0xf]
              %v1423 = vld [vmem:[#allocation15 + $0x2c] sm:$0xf]
              %v1424 = vld [vmem:[#allocation15 + $0x30] sm:$0xf]
              %v1425 = vld [vmem:[#allocation15 + $0x34] sm:$0xf]
              %v1426 = vld [vmem:[#allocation15 + $0x38] sm:$0xf]
              %v1427 = vld [vmem:[#allocation15 + $0x3c] sm:$0xf]
              %v1428 = vld [vmem:[%s8] sm:$0x1]
              %v1430 = vperm.slane %v1428, 0
              %v1448 = vunpack.c.l.b16 %v1412
              %v1449 = vunpack.c.l.b16 %v1413
              %v1450 = vunpack.c.l.b16 %v1414
              %v1451 = vunpack.c.l.b16 %v1415
              %v1452 = vunpack.c.l.b16 %v1416
              %v1453 = vunpack.c.l.b16 %v1417
              %v1454 = vunpack.c.l.b16 %v1418
              %v1455 = vunpack.c.l.b16 %v1419
              %v1456 = vunpack.c.l.b16 %v1420
              %v1457 = vunpack.c.l.b16 %v1421
              %v1458 = vunpack.c.l.b16 %v1422
              %v1459 = vunpack.c.l.b16 %v1423
              %v1460 = vunpack.c.l.b16 %v1424
              %v1461 = vunpack.c.l.b16 %v1425
              %v1462 = vunpack.c.l.b16 %v1426
              %v1463 = vunpack.c.l.b16 %v1427
              %v1464 = vpack.c.b16 %v1449, %v1448
              %v1465 = vpack.c.b16 %v1451, %v1450
              %v1466 = vpack.c.b16 %v1453, %v1452
              %v1467 = vpack.c.b16 %v1455, %v1454
              %v1468 = vpack.c.b16 %v1457, %v1456
              %v1469 = vpack.c.b16 %v1459, %v1458
              %v1470 = vpack.c.b16 %v1461, %v1460
              %v1471 = vpack.c.b16 %v1463, %v1462
              %1480 = vmatpush.bf16.msra.mxu0 %v1471
              %1481 = vmatpush.bf16.msra.mxu0 %v1470
              %1482 = vmatpush.bf16.msra.mxu0 %v1469
              %1483 = vmatpush.bf16.msra.mxu0 %v1468
              %1484 = vmatpush.bf16.msra.mxu0 %v1467
              %1485 = vmatpush.bf16.msra.mxu0 %v1466
              %1486 = vmatpush.bf16.msra.mxu0 %v1465
              %1487 = vmatpush.bf16.msra.mxu0 %v1464
              %1488 = vmatmul.bf16.gmra.mxu0 %v1411
              %v1489 = vpop.f32.mrf.mxu0
              %v1490 = vadd.f32 %v1430, %v1489
              %v1491 = vpop.f32.mrf.mxu0
              %1492 = vdwg.mxu0
              %v1493 = vmax.f32 %v1490, 0.0
              %v1494 = vpack.c.bf16 %v1493, %v1493
              %v1495 = vld [vmem:[#allocation17] sm:$0xf]
              %v1496 = vld [vmem:[#allocation17 + $0x4] sm:$0xf]
              %v1497 = vld [vmem:[#allocation17 + $0x8] sm:$0xf]
              %v1498 = vld [vmem:[#allocation17 + $0xc] sm:$0xf]
              %v1499 = vld [vmem:[#allocation17 + $0x10] sm:$0xf]
              %v1500 = vld [vmem:[#allocation17 + $0x14] sm:$0xf]
              %v1501 = vld [vmem:[#allocation17 + $0x18] sm:$0xf]
              %v1502 = vld [vmem:[#allocation17 + $0x1c] sm:$0xf]
              %v1503 = vld [vmem:[#allocation17 + $0x20] sm:$0xf]
              %v1504 = vld [vmem:[#allocation17 + $0x24] sm:$0xf]
              %v1505 = vld [vmem:[#allocation17 + $0x28] sm:$0xf]
              %v1506 = vld [vmem:[#allocation17 + $0x2c] sm:$0xf]
              %v1507 = vld [vmem:[#allocation17 + $0x30] sm:$0xf]
              %v1508 = vld [vmem:[#allocation17 + $0x34] sm:$0xf]
              %v1509 = vld [vmem:[#allocation17 + $0x38] sm:$0xf]
              %v1510 = vld [vmem:[#allocation17 + $0x3c] sm:$0xf]
              %v1511 = vld [vmem:[%s10] sm:$0x1]
              %v1513 = vperm.slane %v1511, 0
              %v1531 = vunpack.c.l.b16 %v1495
              %v1532 = vunpack.c.l.b16 %v1496
              %v1533 = vunpack.c.l.b16 %v1497
              %v1534 = vunpack.c.l.b16 %v1498
              %v1535 = vunpack.c.l.b16 %v1499
              %v1536 = vunpack.c.l.b16 %v1500
              %v1537 = vunpack.c.l.b16 %v1501
              %v1538 = vunpack.c.l.b16 %v1502
              %v1539 = vunpack.c.l.b16 %v1503
              %v1540 = vunpack.c.l.b16 %v1504
              %v1541 = vunpack.c.l.b16 %v1505
              %v1542 = vunpack.c.l.b16 %v1506
              %v1543 = vunpack.c.l.b16 %v1507
              %v1544 = vunpack.c.l.b16 %v1508
              %v1545 = vunpack.c.l.b16 %v1509
              %v1546 = vunpack.c.l.b16 %v1510
              %v1547 = vpack.c.b16 %v1532, %v1531
              %v1548 = vpack.c.b16 %v1534, %v1533
              %v1549 = vpack.c.b16 %v1536, %v1535
              %v1550 = vpack.c.b16 %v1538, %v1537
              %v1551 = vpack.c.b16 %v1540, %v1539
              %v1552 = vpack.c.b16 %v1542, %v1541
              %v1553 = vpack.c.b16 %v1544, %v1543
              %v1554 = vpack.c.b16 %v1546, %v1545
              %1563 = vmatpush.bf16.msra.mxu0 %v1554
              %1564 = vmatpush.bf16.msra.mxu0 %v1553
              %1565 = vmatpush.bf16.msra.mxu0 %v1552
              %1566 = vmatpush.bf16.msra.mxu0 %v1551
              %1567 = vmatpush.bf16.msra.mxu0 %v1550
              %1568 = vmatpush.bf16.msra.mxu0 %v1549
              %1569 = vmatpush.bf16.msra.mxu0 %v1548
              %1570 = vmatpush.bf16.msra.mxu0 %v1547
              %1571 = vmatmul.bf16.gmra.mxu0 %v1494
              %v1572 = vpop.f32.mrf.mxu0
              %v1573 = vadd.f32 %v1513, %v1572
              %v1574 = vpop.f32.mrf.mxu0
              %1575 = vdwg.mxu0
              %v1576 = vlaneseq
              %v1577 = vand.u32 %v1576, 127
              %vm1578 = vcmp.lt.s32.totalorder %v1577, 16
              %v1579 = vsel %vm1578, %v1573, 0.0
              %1580 = vadd.xlane.f32.xlu0 %v1579
              %v1581 = vpop.xlane.xlu0 %1580
              %v1582 = vmul.f32 %v1581, 0.0625
              %v1583 = vsub.f32 %v1573, %v1582
              %v1584 = vsel %vm1578, %v1583, 0.0
              %v1585 = vmul.f32 %v1584, %v1584
              %1586 = vadd.xlane.f32.xlu0 %v1585
              %v1587 = vpop.xlane.xlu0 %1586
              %v1588 = vmul.f32 %v1587, 0.0625
              %v1589 = vadd.f32 %v1588, 1e-05
              %v1590 = vrsqrt.pop %v1589
              %v1591 = vmul.f32 %v1590, %v1589
              %v1592 = vmul.f32 %v1591, %v1590
              %v1593 = vmul.f32 0.5, %v1592
              %v1594 = vsub.f32 1.5, %v1593
              %v1595 = vmul.f32 %v1590, %v1594
              %vm1596 = vweird.f32 %v1589
              %vm1597 = vweird.f32 %v1590
              %vm1598 = vmor %vm1596, %vm1597
              %v1599 = vsel %vm1598, %v1590, %v1595
              %v1600 = vmul.f32 %v1584, %v1599
              %v1601 = vld [vmem:[%s11] sm:$0x1]
              %v1603 = vperm.slane %v1601, 0
              %v1605 = vmul.f32 %v1600, %v1603
              %v1606 = vld [vmem:[%s12] sm:$0x1]
              %v1608 = vperm.slane %v1606, 0
              %v1610 = vadd.f32 %v1605, %v1608
              %1611 = vst [vmem:[#allocation18] sm:$0xff] %v1610
            $region133: #{tpu_custom_call.1} parent=124 // pred_fallthru
              _
          $region125: #{tpu_custom_call.1} parent=116 // pred_fallthru
            _
        $region117: #{tpu_custom_call.1} parent=67 // pred_fallthru
          _
        // Predicated region
        $region134: #{tpu_custom_call.1} parent=67 // pred_check
          %p1612 = pneg %p361
        $region135: #{tpu_custom_call.1} parent=67 // pred_check_branch
          %1614 = sbr.rel (%p1612) target = $region137
        $region136: #{tpu_custom_call.1} parent=67 // pred_region
          %1616 = vsyncadd [#allocation8], 0
          %s1618 = sshll.u32 [#allocation18], 4
          %s1619 = int_to_ptr.vmem [resolvable:$true] %s1618
          %s1620 = sshll.u32 %s13, 4
          %s1621 = int_to_ptr.hbm [resolvable:$true] %s1620
          %1623 = dma.vmem_to_hbm [thread:$0]  %s1619, 128, %s1621, [#allocation8]
        $region137: #{tpu_custom_call.1} parent=67 // pred_fallthru
          _
        // Predicated region
        $region138: #{tpu_custom_call.1} parent=67 // pred_check
          %p1624 = pneg %p361
        $region139: #{tpu_custom_call.1} parent=67 // pred_check_branch
          %1626 = sbr.rel (%p1624) target = $region141
        $region140: #{tpu_custom_call.1} parent=67 // pred_region
          %1628 = dma.done [#allocation8], 128
        $region141: #{tpu_custom_call.1} parent=67 // pred_fallthru
          _
      $region68: #{tpu_custom_call.1} parent=5 // pred_fallthru
        _
      %p1629 = scmp.le.s32.totalorder 2, %s30
      // Predicated region
      $region142: #{tpu_custom_call.1} parent=5 // pred_check
        %p1630 = pneg %p1629
      $region143: #{tpu_custom_call.1} parent=5 // pred_check_branch
        %1632 = sbr.rel (%p1630) target = $region145
      $region144: #{tpu_custom_call.1} parent=5 // pred_region
        %s1633 = ssub.s32 %s30, 2
      $region145: #{tpu_custom_call.1} parent=5 // pred_fallthru
        _
    $region6: #{tpu_custom_call.1} parent=1 // loop_footer
      %s34 = sadd.s32 1, %s30
    $region7: #{tpu_custom_call.1} parent=1 // loop_footer_branch
      %29 = sbr.rel target = $region3
    $region8: #{tpu_custom_call.1} parent=1 // loop_exit
      _
    %1634 = vsyncpa [#allocation7], 1
    %s1635 = scalar_lea.sflag [#allocation7], 1
    %1636 = vsyncpa %s1635, 1
    %1637 = vsyncpa [#allocation10], 1
    %s1638 = scalar_lea.sflag [#allocation10], 1
    %1639 = vsyncpa %s1638, 1
    %1640 = vsyncpa [#allocation13], 1
    %s1641 = scalar_lea.sflag [#allocation13], 1
    %1642 = vsyncpa %s1641, 1
    %1643 = vsyncpa [#allocation16], 1
    %1644 = vsyncpa [#allocation8], 1
    %s1645 = scalar_lea.sflag [#allocation8], 1
    %1646 = vsyncpa %s1645, 1

</llo_original>
